<compile_context>
chip_gen: v5e
topology: v5e:2x2
jax: 0.10.0
libtpu: 0.0.40
codegen_flags: <defaults>
</compile_context>

<pallas_src>
import inspect

import jax
import jax.numpy as jnp
from jax.experimental import pallas as pl
from jax.experimental.pallas import tpu as pltpu

H1 = 256          # first hidden width (already a multiple of 128)
H2 = 500          # second hidden width in the PyTorch module
H2_PAD = 512      # lane-dense padded second hidden width
LANE = 128

try:
    _SUPPORTS_SINGLE_BUFFER = (
        hasattr(pl, "Buffered")
        and "pipeline_mode" in inspect.signature(pl.BlockSpec).parameters
    )
except (TypeError, ValueError):  # pragma: no cover - signature not inspectable
    _SUPPORTS_SINGLE_BUFFER = False


def _round_up(x, m):
    return ((x + m - 1) // m) * m


def _is_v5e():
    """Best-effort chip detection; only used for the tile-size heuristic."""
    try:
        kind = jax.devices()[0].device_kind.lower()
        return ("v5" in kind) and ("lite" in kind or "v5e" in kind)
    except Exception:
        return False


def _pick_batch_tile(batch):
    """Padding-waste-aware batch tile selection."""
    if _is_v5e():
        # 128 fills the v5e 4x128 MXU M dim and keeps f32 intermediates from
        # spilling through its single vector-store slot.
        single_cap, candidates = 128, (128,)
    else:
        # v6e/v7x: amortize the ~0.35us per-grid-step overhead with big tiles.
        single_cap, candidates = 1024, (512, 384, 256, 128)

    single = _round_up(batch, 8)
    if single <= single_cap:
        return single                      # one grid step, <8 rows of waste
    for t in candidates:                   # largest tile with <12.5% overshoot
        if (_round_up(batch, t) - batch) / batch <= 0.125:
            return t
    return 128


def decoder_kernel(x_ref, w1_ref, b1_ref, w2_ref, b2_ref, w3_ref, b3_ref, o_ref):
    """One batch tile of the full 3-layer MLP. All operands live in VMEM."""
    # Feed the MXU in the weights' storage dtype (bf16 by default); never
    # upcast the (large, resident) weights -- cast the (small) activations.
    mxu_dtype = w1_ref.dtype

    x = x_ref[...].astype(mxu_dtype)

    # Layer 1: Linear(latent -> 256) + ReLU          (f32 accumulation)
    h1 = jnp.dot(x, w1_ref[...], preferred_element_type=jnp.float32)
    h1 = jnp.maximum(h1 + b1_ref[...], 0.0)

    # Layer 2: Linear(256 -> 512[=500 padded]) + ReLU
    h2 = jnp.dot(h1.astype(mxu_dtype), w2_ref[...],
                 preferred_element_type=jnp.float32)
    h2 = jnp.maximum(h2 + b2_ref[...], 0.0)

    # out.view(out.size(0), -1) is a no-op for a 2-D (batch, hidden) tensor.

    # fc: Linear(512 -> out_pad) + Sigmoid (exp runs on the EUP)
    logits = jnp.dot(h2.astype(mxu_dtype), w3_ref[...],
                     preferred_element_type=jnp.float32) + b3_ref[...]
    o_ref[...] = jax.nn.sigmoid(logits).astype(o_ref.dtype)


def decoder_forward(x, params, output_size, *, batch_tile=None,
                    out_dtype=jnp.float32):
    """x: (batch, latent_size) f32 -> (batch, output_size) out_dtype.

    `params` are the lane-dense padded parameters from `init_params`
    (bf16 weights by default; biases always f32).
    """
    w1, b1, w2, b2, w3, b3 = params
    batch, latent = x.shape
    out_pad = w3.shape[1]

    if batch_tile is None:
        batch_tile = _pick_batch_tile(batch)
    batch_tile = max(8, _round_up(int(batch_tile), 8))

    padded_batch = _round_up(batch, batch_tile)
    x_padded = x
    if padded_batch != batch:
        x_padded = jnp.pad(x, ((0, padded_batch - batch), (0, 0)))

    num_steps = padded_batch // batch_tile
    grid = (num_steps,)

    # x / out tiles march over the batch grid (auto double-buffered DMA).
    x_spec = pl.BlockSpec((batch_tile, latent), lambda i: (i, 0))
    out_spec = pl.BlockSpec((batch_tile, out_pad), lambda i: (i, 0))

    # Weights & biases: constant block index -> VMEM resident, no re-DMA.
    def resident(arr, single_buffer):
        if single_buffer:
            # Block index never changes; a single buffer halves resident VMEM.
            return pl.BlockSpec(arr.shape, lambda i: (0, 0),
                                pipeline_mode=pl.Buffered(1))
        return pl.BlockSpec(arr.shape, lambda i: (0, 0))

    weight_bytes = sum(int(p.size) * p.dtype.itemsize for p in params)
    act_step_bytes = batch_tile * (latent * x.dtype.itemsize
                                   + out_pad * jnp.dtype(out_dtype).itemsize)

    # v7x megacore sharding duplicates the resident-weight DMA on the second
    # TensorCore; only enable it when the grid is even and activation traffic
    # amortizes that duplication.  (Near-zero effect on single-TC v5e/v6e.)
    use_parallel = (
        num_steps >= 2
        and num_steps % 2 == 0
        and (act_step_bytes >= weight_bytes
             or num_steps * act_step_bytes >= 4 * weight_bytes)
    )
    dim_sem = ("parallel",) if use_parallel else ("arbitrary",)

    # Scoped VMEM: double-buffered x/out tiles + (worst case double-buffered)
    # resident weights + f32 intermediates, with 2x headroom.
    interm_bytes = batch_tile * (H1 + H2_PAD + out_pad) * 4
    needed = 2 * act_step_bytes + 2 * weight_bytes + interm_bytes
    vmem_limit = int(min(64 << 20, max(32 << 20, 2 * needed)))

    flops = 2 * padded_batch * (latent * H1 + H1 * H2_PAD + H2_PAD * out_pad)
    bytes_accessed = (
        int(x_padded.size) * x_padded.dtype.itemsize
        + weight_bytes
        + padded_batch * out_pad * jnp.dtype(out_dtype).itemsize
    )
    cost = pl.CostEstimate(
        flops=int(flops),
        transcendentals=int(padded_batch * out_pad),   # sigmoid exp
        bytes_accessed=int(bytes_accessed),
    )

    def run(single_buffer):
        in_specs = [x_spec] + [resident(p, single_buffer) for p in params]
        return pl.pallas_call(
            decoder_kernel,
            out_shape=jax.ShapeDtypeStruct((padded_batch, out_pad), out_dtype),
            grid=grid,
            in_specs=in_specs,
            out_specs=out_spec,
            compiler_params=pltpu.CompilerParams(
                dimension_semantics=dim_sem,
                vmem_limit_bytes=vmem_limit,
            ),
            cost_estimate=cost,
        )(x_padded, w1, b1, w2, b2, w3, b3)

    if _SUPPORTS_SINGLE_BUFFER:
        try:
            out = run(True)
        except Exception:          # older JAX without pipeline_mode lowering
            out = run(False)
    else:
        out = run(False)

    # Slice only the axes that were actually padded (an XLA slice is an extra
    # HBM round-trip; skip it when shapes already match).
    if padded_batch == batch and out_pad == output_size:
        return out
    if padded_batch == batch:
        return out[:, :output_size]
    if out_pad == output_size:
        return out[:batch]
    return out[:batch, :output_size]


def init_params(key, latent_size, output_size, weight_dtype=jnp.bfloat16):
    """Deterministic init mimicking torch.nn.Linear (U(-1/sqrt(fan_in), +)),
    returned in lane-dense padded layout:
        w1: (latent, 256)      b1: (1, 256)
        w2: (256, 512)         b2: (1, 512)       (cols 500..511 zero)
        w3: (512, out_pad)     b3: (1, out_pad)   (rows 500..511 / cols >= output_size zero)
    Weights are stored transposed vs. torch (y = x @ W + b) and default to
    bf16 (halves weight HBM traffic; the kernel feeds the MXU in bf16 with
    f32 accumulation).  Biases stay f32.
    """
    out_pad = _round_up(output_size, LANE)
    dims = [(latent_size, H1), (H1, H2), (H2, output_size)]
    raw = []
    for i, (fan_in, fan_out) in enumerate(dims):
        kw, kb = jax.random.split(jax.random.fold_in(key, i))
        bound = 1.0 / (fan_in ** 0.5)
        w = jax.random.uniform(kw, (fan_in, fan_out), jnp.float32, -bound, bound)
        b = jax.random.uniform(kb, (1, fan_out), jnp.float32, -bound, bound)
        raw += [w, b]
    w1, b1, w2, b2, w3, b3 = raw

    # Zero-pad to lane-dense shapes (mathematically inert).
    w2 = jnp.pad(w2, ((0, 0), (0, H2_PAD - H2)))
    b2 = jnp.pad(b2, ((0, 0), (0, H2_PAD - H2)))
    w3 = jnp.pad(w3, ((0, H2_PAD - H2), (0, out_pad - output_size)))
    b3 = jnp.pad(b3, ((0, 0), (0, out_pad - output_size)))

    w1 = w1.astype(weight_dtype)
    w2 = w2.astype(weight_dtype)
    w3 = w3.astype(weight_dtype)
    return (w1, b1, w2, b2, w3, b3)


def decoder_reference(x, params, output_size):
    """Pure-JAX reference mirroring the kernel's numerics exactly
    (activations cast to the weight storage dtype before each dot,
    f32 accumulation / bias / nonlinearities)."""
    w1, b1, w2, b2, w3, b3 = params
    mt = w1.dtype
    h = jnp.dot(x.astype(mt), w1, preferred_element_type=jnp.float32) + b1
    h = jnp.maximum(h, 0.0)
    h = jnp.dot(h.astype(mt), w2, preferred_element_type=jnp.float32) + b2
    h = jnp.maximum(h, 0.0)
    logits = jnp.dot(h.astype(mt), w3, preferred_element_type=jnp.float32) + b3
    return jax.nn.sigmoid(logits)[:, :output_size]


def decoder_reference_f32(x, params, output_size):
    """Full-f32 reference of the original PyTorch module's math."""
    w1, b1, w2, b2, w3, b3 = [p.astype(jnp.float32) for p in params]
    h = jnp.maximum(x @ w1 + b1, 0.0)
    h = jnp.maximum(h @ w2 + b2, 0.0)
    return jax.nn.sigmoid(h @ w3 + b3)[:, :output_size]


if __name__ == "__main__":
    latent_size = 32
    output_size = 64
    batch = 20            # deliberately not tile-aligned to exercise padding

    key = jax.random.PRNGKey(0)
    k_x, k_p = jax.random.split(key)
    x = jax.random.normal(k_x, (batch, latent_size), jnp.float32)

    # 1) f32 weights: bit-tight check of the kernel math (single grid step).
    params_f32 = init_params(k_p, latent_size, output_size,
                             weight_dtype=jnp.float32)
    out_f32 = jax.block_until_ready(decoder_forward(x, params_f32, output_size))
    ref_f32 = decoder_reference_f32(x, params_f32, output_size)
    assert out_f32.shape == (batch, output_size), out_f32.shape
    assert jnp.allclose(out_f32, ref_f32, atol=1e-5, rtol=1e-5)

    # 2) Default bf16 weights (the fast path), batch_tile=8 so the 1-D batch
    #    grid has >1 step (exercises the pipeline + resident weight specs).
    params = init_params(k_p, latent_size, output_size)
    out = jax.block_until_ready(
        decoder_forward(x, params, output_size, batch_tile=8))
    ref = decoder_reference(x, params, output_size)
    assert out.shape == (batch, output_size), out.shape
    assert jnp.allclose(out, ref, atol=1e-5, rtol=1e-5)
    # Sanity vs. the full-f32 module math: only bf16 quantization noise.
    assert jnp.allclose(out, ref_f32, atol=3e-2, rtol=3e-2)

    print("KERNEL_OK")
</pallas_src>

<mosaic_0001>
module attributes {stable_mosaic.version = 11 : i64} {
  func.func @decoder_kernel(%arg0: i32, %arg1: memref<24x32xf32, #tpu.memory_space<vmem>>, %arg2: memref<32x256xf32, #tpu.memory_space<vmem>>, %arg3: memref<1x256xf32, #tpu.memory_space<vmem>>, %arg4: memref<256x512xf32, #tpu.memory_space<vmem>>, %arg5: memref<1x512xf32, #tpu.memory_space<vmem>>, %arg6: memref<512x128xf32, #tpu.memory_space<vmem>>, %arg7: memref<1x128xf32, #tpu.memory_space<vmem>>, %arg8: memref<24x128xf32, #tpu.memory_space<vmem>>) attributes {dimension_semantics = [#tpu.dimension_semantics<arbitrary>], iteration_bounds = array<i64: 1>, scalar_prefetch = 0 : i64, scratch_operands = 0 : i64, tpu.core_type = #tpu.core_type<tc>, window_params = [{transform_indices = @transform_0, window_bounds = array<i64: 24, 32>}, {pipeline_mode = #tpu.pipeline_mode<synchronous>, transform_indices = @transform_1, window_bounds = array<i64: 32, 256>}, {pipeline_mode = #tpu.pipeline_mode<synchronous>, transform_indices = @transform_2, window_bounds = array<i64: 1, 256>}, {pipeline_mode = #tpu.pipeline_mode<synchronous>, transform_indices = @transform_3, window_bounds = array<i64: 256, 512>}, {pipeline_mode = #tpu.pipeline_mode<synchronous>, transform_indices = @transform_4, window_bounds = array<i64: 1, 512>}, {pipeline_mode = #tpu.pipeline_mode<synchronous>, transform_indices = @transform_5, window_bounds = array<i64: 512, 128>}, {pipeline_mode = #tpu.pipeline_mode<synchronous>, transform_indices = @transform_6, window_bounds = array<i64: 1, 128>}, {transform_indices = @transform_7, window_bounds = array<i64: 24, 128>}]} {
    %c0 = arith.constant 0 : index
    %c0_0 = arith.constant 0 : index
    %0 = vector.load %arg1[%c0, %c0_0] : memref<24x32xf32, #tpu.memory_space<vmem>>, vector<24x32xf32>
    %c0_1 = arith.constant 0 : index
    %c0_2 = arith.constant 0 : index
    %1 = vector.load %arg2[%c0_1, %c0_2] : memref<32x256xf32, #tpu.memory_space<vmem>>, vector<32x256xf32>
    %cst = arith.constant dense<0.000000e+00> : vector<24x256xf32>
    %2 = tpu.matmul %0, %1, %cst {dimension_numbers = #tpu.dot_dimension_numbers<[1], [0], [0], [1], [0, 0, 1, 1], [], []>} : vector<24x32xf32>, vector<32x256xf32>, vector<24x256xf32> -> vector<24x256xf32>
    %c0_3 = arith.constant 0 : index
    %c0_4 = arith.constant 0 : index
    %3 = vector.load %arg3[%c0_3, %c0_4] : memref<1x256xf32, #tpu.memory_space<vmem>>, vector<1x256xf32>
    %4 = vector.broadcast %3 : vector<1x256xf32> to vector<24x256xf32>
    %5 = arith.addf %2, %4 : vector<24x256xf32>
    %cst_5 = arith.constant 0.000000e+00 : f32
    %6 = vector.broadcast %cst_5 : f32 to vector<24x256xf32>
    %7 = arith.maximumf %5, %6 : vector<24x256xf32>
    %c0_6 = arith.constant 0 : index
    %c0_7 = arith.constant 0 : index
    %8 = vector.load %arg4[%c0_6, %c0_7] : memref<256x512xf32, #tpu.memory_space<vmem>>, vector<256x512xf32>
    %cst_8 = arith.constant dense<0.000000e+00> : vector<24x512xf32>
    %9 = tpu.matmul %7, %8, %cst_8 {dimension_numbers = #tpu.dot_dimension_numbers<[1], [0], [0], [1], [0, 0, 1, 1], [], []>} : vector<24x256xf32>, vector<256x512xf32>, vector<24x512xf32> -> vector<24x512xf32>
    %c0_9 = arith.constant 0 : index
    %c0_10 = arith.constant 0 : index
    %10 = vector.load %arg5[%c0_9, %c0_10] : memref<1x512xf32, #tpu.memory_space<vmem>>, vector<1x512xf32>
    %11 = vector.broadcast %10 : vector<1x512xf32> to vector<24x512xf32>
    %12 = arith.addf %9, %11 : vector<24x512xf32>
    %cst_11 = arith.constant 0.000000e+00 : f32
    %13 = vector.broadcast %cst_11 : f32 to vector<24x512xf32>
    %14 = arith.maximumf %12, %13 : vector<24x512xf32>
    %c0_12 = arith.constant 0 : index
    %c0_13 = arith.constant 0 : index
    %15 = vector.load %arg6[%c0_12, %c0_13] : memref<512x128xf32, #tpu.memory_space<vmem>>, vector<512x128xf32>
    %cst_14 = arith.constant dense<0.000000e+00> : vector<24x128xf32>
    %16 = tpu.matmul %14, %15, %cst_14 {dimension_numbers = #tpu.dot_dimension_numbers<[1], [0], [0], [1], [0, 0, 1, 1], [], []>} : vector<24x512xf32>, vector<512x128xf32>, vector<24x128xf32> -> vector<24x128xf32>
    %c0_15 = arith.constant 0 : index
    %c0_16 = arith.constant 0 : index
    %17 = vector.load %arg7[%c0_15, %c0_16] : memref<1x128xf32, #tpu.memory_space<vmem>>, vector<1x128xf32>
    %18 = vector.broadcast %17 : vector<1x128xf32> to vector<24x128xf32>
    %19 = arith.addf %16, %18 : vector<24x128xf32>
    %20 = arith.negf %19 : vector<24x128xf32>
    %21 = math.exp %20 : vector<24x128xf32>
    %cst_17 = arith.constant 1.000000e+00 : f32
    %22 = vector.broadcast %cst_17 : f32 to vector<24x128xf32>
    %23 = arith.addf %22, %21 : vector<24x128xf32>
    %24 = arith.divf %22, %23 : vector<24x128xf32>
    %c0_18 = arith.constant 0 : index
    %c0_19 = arith.constant 0 : index
    %25 = vector.load %arg8[%c0_18, %c0_19] : memref<24x128xf32, #tpu.memory_space<vmem>>, vector<24x128xf32>
    tpu.vector_store %arg8[%c0_18, %c0_19], %24 {strides = array<i32>} : memref<24x128xf32, #tpu.memory_space<vmem>>, vector<24x128xf32>,
    return
  }
  func.func @transform_0(%arg0: i32) -> (i32, i32) {
    %c0_i32 = arith.constant 0 : i32
    %c0_i32_0 = arith.constant 0 : i32
    return %arg0, %c0_i32 : i32, i32
  }
  func.func @transform_1(%arg0: i32) -> (i32, i32) {
    %c0_i32 = arith.constant 0 : i32
    %c0_i32_0 = arith.constant 0 : i32
    %c0_i32_1 = arith.constant 0 : i32
    return %c0_i32, %c0_i32_0 : i32, i32
  }
  func.func @transform_2(%arg0: i32) -> (i32, i32) {
    %c0_i32 = arith.constant 0 : i32
    %c0_i32_0 = arith.constant 0 : i32
    %c0_i32_1 = arith.constant 0 : i32
    return %c0_i32, %c0_i32_0 : i32, i32
  }
  func.func @transform_3(%arg0: i32) -> (i32, i32) {
    %c0_i32 = arith.constant 0 : i32
    %c0_i32_0 = arith.constant 0 : i32
    %c0_i32_1 = arith.constant 0 : i32
    return %c0_i32, %c0_i32_0 : i32, i32
  }
  func.func @transform_4(%arg0: i32) -> (i32, i32) {
    %c0_i32 = arith.constant 0 : i32
    %c0_i32_0 = arith.constant 0 : i32
    %c0_i32_1 = arith.constant 0 : i32
    return %c0_i32, %c0_i32_0 : i32, i32
  }
  func.func @transform_5(%arg0: i32) -> (i32, i32) {
    %c0_i32 = arith.constant 0 : i32
    %c0_i32_0 = arith.constant 0 : i32
    %c0_i32_1 = arith.constant 0 : i32
    return %c0_i32, %c0_i32_0 : i32, i32
  }
  func.func @transform_6(%arg0: i32) -> (i32, i32) {
    %c0_i32 = arith.constant 0 : i32
    %c0_i32_0 = arith.constant 0 : i32
    %c0_i32_1 = arith.constant 0 : i32
    return %c0_i32, %c0_i32_0 : i32, i32
  }
  func.func @transform_7(%arg0: i32) -> (i32, i32) {
    %c0_i32 = arith.constant 0 : i32
    %c0_i32_0 = arith.constant 0 : i32
    return %arg0, %c0_i32 : i32, i32
  }
}

module attributes {stable_mosaic.version = 11 : i64} {
  func.func @decoder_kernel(%arg0: i32, %arg1: memref<24x32xf32, #tpu.memory_space<vmem>>, %arg2: memref<32x256xf32, #tpu.memory_space<vmem>>, %arg3: memref<1x256xf32, #tpu.memory_space<vmem>>, %arg4: memref<256x512xf32, #tpu.memory_space<vmem>>, %arg5: memref<1x512xf32, #tpu.memory_space<vmem>>, %arg6: memref<512x128xf32, #tpu.memory_space<vmem>>, %arg7: memref<1x128xf32, #tpu.memory_space<vmem>>, %arg8: memref<24x128xf32, #tpu.memory_space<vmem>>) attributes {dimension_semantics = [#tpu.dimension_semantics<arbitrary>], iteration_bounds = array<i64: 1>, scalar_prefetch = 0 : i64, scratch_operands = 0 : i64, tpu.core_type = #tpu.core_type<tc>, window_params = [{transform_indices = @transform_0, window_bounds = array<i64: 24, 32>}, {pipeline_mode = #tpu.pipeline_mode<synchronous>, transform_indices = @transform_1, window_bounds = array<i64: 32, 256>}, {pipeline_mode = #tpu.pipeline_mode<synchronous>, transform_indices = @transform_2, window_bounds = array<i64: 1, 256>}, {pipeline_mode = #tpu.pipeline_mode<synchronous>, transform_indices = @transform_3, window_bounds = array<i64: 256, 512>}, {pipeline_mode = #tpu.pipeline_mode<synchronous>, transform_indices = @transform_4, window_bounds = array<i64: 1, 512>}, {pipeline_mode = #tpu.pipeline_mode<synchronous>, transform_indices = @transform_5, window_bounds = array<i64: 512, 128>}, {pipeline_mode = #tpu.pipeline_mode<synchronous>, transform_indices = @transform_6, window_bounds = array<i64: 1, 128>}, {transform_indices = @transform_7, window_bounds = array<i64: 24, 128>}]} {
    %c0 = arith.constant 0 : index
    %c0_0 = arith.constant 0 : index
    %0 = vector.load %arg1[%c0, %c0_0] : memref<24x32xf32, #tpu.memory_space<vmem>>, vector<24x32xf32>
    %c0_1 = arith.constant 0 : index
    %c0_2 = arith.constant 0 : index
    %1 = vector.load %arg2[%c0_1, %c0_2] : memref<32x256xf32, #tpu.memory_space<vmem>>, vector<32x256xf32>
    %cst = arith.constant dense<0.000000e+00> : vector<24x256xf32>
    %2 = tpu.matmul %0, %1, %cst {dimension_numbers = #tpu.dot_dimension_numbers<[1], [0], [0], [1], [0, 0, 1, 1], [], []>} : vector<24x32xf32>, vector<32x256xf32>, vector<24x256xf32> -> vector<24x256xf32>
    %c0_3 = arith.constant 0 : index
    %c0_4 = arith.constant 0 : index
    %3 = vector.load %arg3[%c0_3, %c0_4] : memref<1x256xf32, #tpu.memory_space<vmem>>, vector<1x256xf32>
    %4 = vector.broadcast %3 : vector<1x256xf32> to vector<24x256xf32>
    %5 = arith.addf %2, %4 : vector<24x256xf32>
    %cst_5 = arith.constant 0.000000e+00 : f32
    %6 = vector.broadcast %cst_5 : f32 to vector<24x256xf32>
    %7 = arith.maximumf %5, %6 : vector<24x256xf32>
    %c0_6 = arith.constant 0 : index
    %c0_7 = arith.constant 0 : index
    %8 = vector.load %arg4[%c0_6, %c0_7] : memref<256x512xf32, #tpu.memory_space<vmem>>, vector<256x512xf32>
    %cst_8 = arith.constant dense<0.000000e+00> : vector<24x512xf32>
    %9 = tpu.matmul %7, %8, %cst_8 {dimension_numbers = #tpu.dot_dimension_numbers<[1], [0], [0], [1], [0, 0, 1, 1], [], []>} : vector<24x256xf32>, vector<256x512xf32>, vector<24x512xf32> -> vector<24x512xf32>
    %c0_9 = arith.constant 0 : index
    %c0_10 = arith.constant 0 : index
    %10 = vector.load %arg5[%c0_9, %c0_10] : memref<1x512xf32, #tpu.memory_space<vmem>>, vector<1x512xf32>
    %11 = vector.broadcast %10 : vector<1x512xf32> to vector<24x512xf32>
    %12 = arith.addf %9, %11 : vector<24x512xf32>
    %cst_11 = arith.constant 0.000000e+00 : f32
    %13 = vector.broadcast %cst_11 : f32 to vector<24x512xf32>
    %14 = arith.maximumf %12, %13 : vector<24x512xf32>
    %c0_12 = arith.constant 0 : index
    %c0_13 = arith.constant 0 : index
    %15 = vector.load %arg6[%c0_12, %c0_13] : memref<512x128xf32, #tpu.memory_space<vmem>>, vector<512x128xf32>
    %cst_14 = arith.constant dense<0.000000e+00> : vector<24x128xf32>
    %16 = tpu.matmul %14, %15, %cst_14 {dimension_numbers = #tpu.dot_dimension_numbers<[1], [0], [0], [1], [0, 0, 1, 1], [], []>} : vector<24x512xf32>, vector<512x128xf32>, vector<24x128xf32> -> vector<24x128xf32>
    %c0_15 = arith.constant 0 : index
    %c0_16 = arith.constant 0 : index
    %17 = vector.load %arg7[%c0_15, %c0_16] : memref<1x128xf32, #tpu.memory_space<vmem>>, vector<1x128xf32>
    %18 = vector.broadcast %17 : vector<1x128xf32> to vector<24x128xf32>
    %19 = arith.addf %16, %18 : vector<24x128xf32>
    %20 = arith.negf %19 : vector<24x128xf32>
    %21 = math.exp %20 : vector<24x128xf32>
    %cst_17 = arith.constant 1.000000e+00 : f32
    %22 = vector.broadcast %cst_17 : f32 to vector<24x128xf32>
    %23 = arith.addf %22, %21 : vector<24x128xf32>
    %24 = arith.divf %22, %23 : vector<24x128xf32>
    %c0_18 = arith.constant 0 : index
    %c0_19 = arith.constant 0 : index
    %25 = vector.load %arg8[%c0_18, %c0_19] : memref<24x128xf32, #tpu.memory_space<vmem>>, vector<24x128xf32>
    tpu.vector_store %arg8[%c0_18, %c0_19], %24 {strides = array<i32>} : memref<24x128xf32, #tpu.memory_space<vmem>>, vector<24x128xf32>,
    return
  }
  func.func @transform_0(%arg0: i32) -> (i32, i32) {
    %c0_i32 = arith.constant 0 : i32
    %c0_i32_0 = arith.constant 0 : i32
    return %arg0, %c0_i32 : i32, i32
  }
  func.func @transform_1(%arg0: i32) -> (i32, i32) {
    %c0_i32 = arith.constant 0 : i32
    %c0_i32_0 = arith.constant 0 : i32
    %c0_i32_1 = arith.constant 0 : i32
    return %c0_i32, %c0_i32_0 : i32, i32
  }
  func.func @transform_2(%arg0: i32) -> (i32, i32) {
    %c0_i32 = arith.constant 0 : i32
    %c0_i32_0 = arith.constant 0 : i32
    %c0_i32_1 = arith.constant 0 : i32
    return %c0_i32, %c0_i32_0 : i32, i32
  }
  func.func @transform_3(%arg0: i32) -> (i32, i32) {
    %c0_i32 = arith.constant 0 : i32
    %c0_i32_0 = arith.constant 0 : i32
    %c0_i32_1 = arith.constant 0 : i32
    return %c0_i32, %c0_i32_0 : i32, i32
  }
  func.func @transform_4(%arg0: i32) -> (i32, i32) {
    %c0_i32 = arith.constant 0 : i32
    %c0_i32_0 = arith.constant 0 : i32
    %c0_i32_1 = arith.constant 0 : i32
    return %c0_i32, %c0_i32_0 : i32, i32
  }
  func.func @transform_5(%arg0: i32) -> (i32, i32) {
    %c0_i32 = arith.constant 0 : i32
    %c0_i32_0 = arith.constant 0 : i32
    %c0_i32_1 = arith.constant 0 : i32
    return %c0_i32, %c0_i32_0 : i32, i32
  }
  func.func @transform_6(%arg0: i32) -> (i32, i32) {
    %c0_i32 = arith.constant 0 : i32
    %c0_i32_0 = arith.constant 0 : i32
    %c0_i32_1 = arith.constant 0 : i32
    return %c0_i32, %c0_i32_0 : i32, i32
  }
  func.func @transform_7(%arg0: i32) -> (i32, i32) {
    %c0_i32 = arith.constant 0 : i32
    %c0_i32_0 = arith.constant 0 : i32
    return %arg0, %c0_i32 : i32, i32
  }
}

</mosaic_0001>

<llo_original>
// kernel: tpu_custom_call.1
$region0: #{tpu_custom_call.1}
  #allocation0 [shape = 'u32[]', space=smem, size = 0x4, offset = 0x4, fixed_abs, tag = 'smem constant byte address 0x4 - core index']
  #allocation1 [shape = 'u32[72,128]{1,0:T(1,128)}', space=vmem, size = 0x9000, scoped, tag = 'internal scratch']
  %s0 = inlined_call_operand.hbm [shape: f32[24,32], index: 0, kind: input, shape index: {}]
  %s1 = inlined_call_operand.hbm [shape: f32[32,256], index: 1, kind: input, shape index: {}]
  %s2 = inlined_call_operand.hbm [shape: f32[1,256], index: 2, kind: input, shape index: {}]
  %s3 = inlined_call_operand.hbm [shape: f32[256,512], index: 3, kind: input, shape index: {}]
  %s4 = inlined_call_operand.hbm [shape: f32[1,512], index: 4, kind: input, shape index: {}]
  %s5 = inlined_call_operand.hbm [shape: f32[512,128], index: 5, kind: input, shape index: {}]
  %s6 = inlined_call_operand.vmem [shape: f32[1,128], index: 6, kind: input, shape index: {}]
  %s7 = inlined_call_operand.hbm [shape: f32[24,128], index: 7, kind: output, shape index: {}]
  %s8 = sld [smem:[#allocation0]]
  $region62: #{tpu_custom_call.1} parent=0
    _
  %s10 = ssub.s32 1, %s8
  %s11 = scalar_select 0, %s10, %s8
  $region1: #{tpu_custom_call.1} parent=0
    #allocation2 [shape = 'u8[12288]{0}', space=vmem, size = 0x3000, scoped, tag = 'input window, operand 0, single buffered']
    #allocation3 [shape = 's32[1]{0}', space=sflag, size = 0x4, scoped, tag = 'scoped memory for tpu_custom_call.1']
    #allocation4 [shape = 's32[1]{0}', space=sflag, size = 0x4, scoped, tag = 'scoped memory for tpu_custom_call.1']
    #allocation5 [shape = 'u8[32768]{0}', space=vmem, size = 0x8000, scoped, tag = 'input window, operand 1, single buffered']
    #allocation6 [shape = 's32[1]{0}', space=sflag, size = 0x4, scoped, tag = 'scoped memory for tpu_custom_call.1']
    #allocation7 [shape = 'u8[1024]{0}', space=vmem, size = 0x400, scoped, tag = 'input window, operand 2, single buffered']
    #allocation8 [shape = 'u8[524288]{0}', space=vmem, size = 0x80000, scoped, tag = 'input window, operand 3, single buffered']
    #allocation9 [shape = 's32[1]{0}', space=sflag, size = 0x4, scoped, tag = 'scoped memory for tpu_custom_call.1']
    #allocation10 [shape = 'u8[2048]{0}', space=vmem, size = 0x800, scoped, tag = 'input window, operand 4, single buffered']
    #allocation11 [shape = 'u8[262144]{0}', space=vmem, size = 0x40000, scoped, tag = 'input window, operand 5, single buffered']
    #allocation12 [shape = 's32[1]{0}', space=sflag, size = 0x4, scoped, tag = 'scoped memory for tpu_custom_call.1']
    #allocation13 [shape = 'u8[12288]{0}', space=vmem, size = 0x3000, scoped, tag = 'output window, operand 0, single buffered']
    %12 = vsyncpa [#allocation3], 0
    %13 = vsyncpa [#allocation6], 0
    %14 = vsyncpa [#allocation9], 0
    %15 = vsyncpa [#allocation12], 0
    %16 = vsyncpa [#allocation4], 0
    // Predicated region
    $region2: #{tpu_custom_call.1} parent=1 // pred_check
      _
    $region3: #{tpu_custom_call.1} parent=1 // pred_check_branch
      %18 = sbr.rel (0) target = $region5
    $region4: #{tpu_custom_call.1} parent=1 // pred_region
      %20 = vsyncadd [#allocation3], 0
      %s21 = sshll.u32 %s0, 4
      %s22 = int_to_ptr.hbm [resolvable:$true] %s21
      %s23 = sshll.u32 [#allocation2], 4
      %s24 = int_to_ptr.vmem [resolvable:$true] %s23
      %29 = dma.hbm_to_vmem [thread:$0]  %s22, 384, %s24, [#allocation3], 128, 128, 8
    $region5: #{tpu_custom_call.1} parent=1 // pred_fallthru
      _
    // Predicated region
    $region6: #{tpu_custom_call.1} parent=1 // pred_check
      _
    $region7: #{tpu_custom_call.1} parent=1 // pred_check_branch
      %31 = sbr.rel (0) target = $region9
    $region8: #{tpu_custom_call.1} parent=1 // pred_region
      %33 = vsyncadd [#allocation6], 0
      %s34 = sshll.u32 %s1, 4
      %s35 = int_to_ptr.hbm [resolvable:$true] %s34
      %s36 = sshll.u32 [#allocation5], 4
      %s37 = int_to_ptr.vmem [resolvable:$true] %s36
      %42 = dma.hbm_to_vmem [thread:$0]  %s35, 1024, %s37, [#allocation6], 256, 256, 16
    $region9: #{tpu_custom_call.1} parent=1 // pred_fallthru
      _
    // Predicated region
    $region10: #{tpu_custom_call.1} parent=1 // pred_check
      _
    $region11: #{tpu_custom_call.1} parent=1 // pred_check_branch
      %44 = sbr.rel (0) target = $region13
    $region12: #{tpu_custom_call.1} parent=1 // pred_region
      %46 = vsyncadd [#allocation6], 0
      %s48 = sshll.u32 %s2, 4
      %s49 = int_to_ptr.hbm [resolvable:$true] %s48
      %s50 = sshll.u32 [#allocation7], 4
      %s51 = int_to_ptr.vmem [resolvable:$true] %s50
      %53 = dma.hbm_to_vmem [thread:$0]  %s49, 32, %s51, [#allocation6]
    $region13: #{tpu_custom_call.1} parent=1 // pred_fallthru
      _
    // Predicated region
    $region14: #{tpu_custom_call.1} parent=1 // pred_check
      _
    $region15: #{tpu_custom_call.1} parent=1 // pred_check_branch
      %55 = sbr.rel (0) target = $region17
    $region16: #{tpu_custom_call.1} parent=1 // pred_region
      %57 = vsyncadd [#allocation9], 0
      %s58 = sshll.u32 %s3, 4
      %s59 = int_to_ptr.hbm [resolvable:$true] %s58
      %s60 = sshll.u32 [#allocation8], 4
      %s61 = int_to_ptr.vmem [resolvable:$true] %s60
      %66 = dma.hbm_to_vmem [thread:$0]  %s59, 16384, %s61, [#allocation9], 512, 512, 32
    $region17: #{tpu_custom_call.1} parent=1 // pred_fallthru
      _
    // Predicated region
    $region18: #{tpu_custom_call.1} parent=1 // pred_check
      _
    $region19: #{tpu_custom_call.1} parent=1 // pred_check_branch
      %68 = sbr.rel (0) target = $region21
    $region20: #{tpu_custom_call.1} parent=1 // pred_region
      %70 = vsyncadd [#allocation9], 0
      %s72 = sshll.u32 %s4, 4
      %s73 = int_to_ptr.hbm [resolvable:$true] %s72
      %s74 = sshll.u32 [#allocation10], 4
      %s75 = int_to_ptr.vmem [resolvable:$true] %s74
      %77 = dma.hbm_to_vmem [thread:$0]  %s73, 64, %s75, [#allocation9]
    $region21: #{tpu_custom_call.1} parent=1 // pred_fallthru
      _
    // Predicated region
    $region22: #{tpu_custom_call.1} parent=1 // pred_check
      _
    $region23: #{tpu_custom_call.1} parent=1 // pred_check_branch
      %79 = sbr.rel (0) target = $region25
    $region24: #{tpu_custom_call.1} parent=1 // pred_region
      %81 = vsyncadd [#allocation12], 0
      %s82 = sshll.u32 %s5, 4
      %s83 = int_to_ptr.hbm [resolvable:$true] %s82
      %s84 = sshll.u32 [#allocation11], 4
      %s85 = int_to_ptr.vmem [resolvable:$true] %s84
      %90 = dma.hbm_to_vmem [thread:$0]  %s83, 8192, %s85, [#allocation12], 128, 128, 8
    $region25: #{tpu_custom_call.1} parent=1 // pred_fallthru
      _
    // Predicated region
    $region26: #{tpu_custom_call.1} parent=1 // pred_check
      _
    $region27: #{tpu_custom_call.1} parent=1 // pred_check_branch
      %92 = sbr.rel (0) target = $region29
    $region28: #{tpu_custom_call.1} parent=1 // pred_region
      _
    $region29: #{tpu_custom_call.1} parent=1 // pred_fallthru
      _
    // Predicated region
    $region30: #{tpu_custom_call.1} parent=1 // pred_check
      _
    $region31: #{tpu_custom_call.1} parent=1 // pred_check_branch
      %94 = sbr.rel (0) target = $region33
    $region32: #{tpu_custom_call.1} parent=1 // pred_region
      %96 = dma.done [#allocation3], 384
    $region33: #{tpu_custom_call.1} parent=1 // pred_fallthru
      _
    // Predicated region
    $region34: #{tpu_custom_call.1} parent=1 // pred_check
      _
    $region35: #{tpu_custom_call.1} parent=1 // pred_check_branch
      %98 = sbr.rel (0) target = $region37
    $region36: #{tpu_custom_call.1} parent=1 // pred_region
      %100 = dma.done [#allocation6], 1024
    $region37: #{tpu_custom_call.1} parent=1 // pred_fallthru
      _
    // Predicated region
    $region38: #{tpu_custom_call.1} parent=1 // pred_check
      _
    $region39: #{tpu_custom_call.1} parent=1 // pred_check_branch
      %102 = sbr.rel (0) target = $region41
    $region40: #{tpu_custom_call.1} parent=1 // pred_region
      %104 = dma.done [#allocation6], 32
    $region41: #{tpu_custom_call.1} parent=1 // pred_fallthru
      _
    // Predicated region
    $region42: #{tpu_custom_call.1} parent=1 // pred_check
      _
    $region43: #{tpu_custom_call.1} parent=1 // pred_check_branch
      %106 = sbr.rel (0) target = $region45
    $region44: #{tpu_custom_call.1} parent=1 // pred_region
      %108 = dma.done [#allocation9], 16384
    $region45: #{tpu_custom_call.1} parent=1 // pred_fallthru
      _
    // Predicated region
    $region46: #{tpu_custom_call.1} parent=1 // pred_check
      _
    $region47: #{tpu_custom_call.1} parent=1 // pred_check_branch
      %110 = sbr.rel (0) target = $region49
    $region48: #{tpu_custom_call.1} parent=1 // pred_region
      %112 = dma.done [#allocation9], 64
    $region49: #{tpu_custom_call.1} parent=1 // pred_fallthru
      _
    // Predicated region
    $region50: #{tpu_custom_call.1} parent=1 // pred_check
      _
    $region51: #{tpu_custom_call.1} parent=1 // pred_check_branch
      %114 = sbr.rel (0) target = $region53
    $region52: #{tpu_custom_call.1} parent=1 // pred_region
      %116 = dma.done [#allocation12], 8192
    $region53: #{tpu_custom_call.1} parent=1 // pred_fallthru
      _
    %v117 = vld [vmem:[#allocation2] sm:$0xff]
    %v118 = vld [vmem:[#allocation2 + $0x8] sm:$0xff]
    %v119 = vld [vmem:[#allocation2 + $0x10] sm:$0xff]
    %v120 = vld [vmem:[#allocation5] sm:$0xff]
    %v121 = vld [vmem:[#allocation5 + $0x8] sm:$0xff]
    %v122 = vld [vmem:[#allocation5 + $0x10] sm:$0xff]
    %v123 = vld [vmem:[#allocation5 + $0x18] sm:$0xff]
    %v124 = vld [vmem:[#allocation5 + $0x20] sm:$0xff]
    %v125 = vld [vmem:[#allocation5 + $0x28] sm:$0xff]
    %v126 = vld [vmem:[#allocation5 + $0x30] sm:$0xff]
    %v127 = vld [vmem:[#allocation5 + $0x38] sm:$0xff]
    %v128 = vld [vmem:[#allocation7] sm:$0x3]
    %v130 = vperm.slane %v128, 0
    %v131 = vperm.slane %v128, 1
    %vm134 = vcmask 261120
    %v136 = vsel %vm134, %v117, 0
    %v139 = vsel %vm134, %v118, 0
    %v142 = vsel %vm134, %v119, 0
    %144 = vmatpush.msra.mxu0 0.0
    %145 = vmatpush.msra.mxu0 0.0
    %146 = vmatpush.msra.mxu0 0.0
    %147 = vmatpush.msra.mxu0 0.0
    %148 = vmatpush.msra.mxu0 0.0
    %149 = vmatpush.msra.mxu0 0.0
    %150 = vmatpush.msra.mxu0 0.0
    %151 = vmatpush.msra.mxu0 0.0
    %152 = vmatpush.msra.mxu0 0.0
    %153 = vmatpush.msra.mxu0 0.0
    %154 = vmatpush.msra.mxu0 0.0
    %155 = vmatpush.msra.mxu0 0.0
    %156 = vmatpush.msra.mxu0 %v126
    %157 = vmatpush.msra.mxu0 %v124
    %158 = vmatpush.msra.mxu0 %v122
    %159 = vmatpush.msra.mxu0 %v120
    %160 = vmatmul.f32.gmra.mxu0 %v136
    %v161 = vpop.f32.mrf.mxu0
    %v162 = vadd.f32 %v130, %v161
    %163 = vmatmul.f32.gmra.mxu0 %v139
    %v164 = vpop.f32.mrf.mxu0
    %v165 = vadd.f32 %v130, %v164
    %166 = vmatmul.f32.gmra.mxu0 %v142
    %v167 = vpop.f32.mrf.mxu0
    %v168 = vadd.f32 %v130, %v167
    %169 = vdwg.mxu0
    %170 = vmatpush.msra.mxu0 0.0
    %171 = vmatpush.msra.mxu0 0.0
    %172 = vmatpush.msra.mxu0 0.0
    %173 = vmatpush.msra.mxu0 0.0
    %174 = vmatpush.msra.mxu0 0.0
    %175 = vmatpush.msra.mxu0 0.0
    %176 = vmatpush.msra.mxu0 0.0
    %177 = vmatpush.msra.mxu0 0.0
    %178 = vmatpush.msra.mxu0 0.0
    %179 = vmatpush.msra.mxu0 0.0
    %180 = vmatpush.msra.mxu0 0.0
    %181 = vmatpush.msra.mxu0 0.0
    %182 = vmatpush.msra.mxu0 %v127
    %183 = vmatpush.msra.mxu0 %v125
    %184 = vmatpush.msra.mxu0 %v123
    %185 = vmatpush.msra.mxu0 %v121
    %186 = vmatmul.f32.gmra.mxu0 %v136
    %v187 = vpop.f32.mrf.mxu0
    %v188 = vadd.f32 %v131, %v187
    %189 = vmatmul.f32.gmra.mxu0 %v139
    %v190 = vpop.f32.mrf.mxu0
    %v191 = vadd.f32 %v131, %v190
    %192 = vmatmul.f32.gmra.mxu0 %v142
    %v193 = vpop.f32.mrf.mxu0
    %v194 = vadd.f32 %v131, %v193
    %195 = vdwg.mxu0
    %v196 = vmax.f32 %v162, 0.0
    %v197 = vmax.f32 %v188, 0.0
    %v198 = vmax.f32 %v165, 0.0
    %v199 = vmax.f32 %v191, 0.0
    %v200 = vmax.f32 %v168, 0.0
    %v201 = vmax.f32 %v194, 0.0
    %v202 = vld [vmem:[#allocation8] sm:$0xff]
    %v203 = vld [vmem:[#allocation8 + $0x8] sm:$0xff]
    %v204 = vld [vmem:[#allocation8 + $0x10] sm:$0xff]
    %v205 = vld [vmem:[#allocation8 + $0x18] sm:$0xff]
    %v206 = vld [vmem:[#allocation8 + $0x20] sm:$0xff]
    %v207 = vld [vmem:[#allocation8 + $0x28] sm:$0xff]
    %v208 = vld [vmem:[#allocation8 + $0x30] sm:$0xff]
    %v209 = vld [vmem:[#allocation8 + $0x38] sm:$0xff]
    %v210 = vld [vmem:[#allocation8 + $0x40] sm:$0xff]
    %v211 = vld [vmem:[#allocation8 + $0x48] sm:$0xff]
    %v212 = vld [vmem:[#allocation8 + $0x50] sm:$0xff]
    %v213 = vld [vmem:[#allocation8 + $0x58] sm:$0xff]
    %v214 = vld [vmem:[#allocation8 + $0x60] sm:$0xff]
    %v215 = vld [vmem:[#allocation8 + $0x68] sm:$0xff]
    %v216 = vld [vmem:[#allocation8 + $0x70] sm:$0xff]
    %v217 = vld [vmem:[#allocation8 + $0x78] sm:$0xff]
    %v218 = vld [vmem:[#allocation8 + $0x80] sm:$0xff]
    %v219 = vld [vmem:[#allocation8 + $0x88] sm:$0xff]
    %v220 = vld [vmem:[#allocation8 + $0x90] sm:$0xff]
    %v221 = vld [vmem:[#allocation8 + $0x98] sm:$0xff]
    %v222 = vld [vmem:[#allocation8 + $0xa0] sm:$0xff]
    %v223 = vld [vmem:[#allocation8 + $0xa8] sm:$0xff]
    %v224 = vld [vmem:[#allocation8 + $0xb0] sm:$0xff]
    %v225 = vld [vmem:[#allocation8 + $0xb8] sm:$0xff]
    %v226 = vld [vmem:[#allocation8 + $0xc0] sm:$0xff]
    %v227 = vld [vmem:[#allocation8 + $0xc8] sm:$0xff]
    %v228 = vld [vmem:[#allocation8 + $0xd0] sm:$0xff]
    %v229 = vld [vmem:[#allocation8 + $0xd8] sm:$0xff]
    %v230 = vld [vmem:[#allocation8 + $0xe0] sm:$0xff]
    %v231 = vld [vmem:[#allocation8 + $0xe8] sm:$0xff]
    %v232 = vld [vmem:[#allocation8 + $0xf0] sm:$0xff]
    %v233 = vld [vmem:[#allocation8 + $0xf8] sm:$0xff]
    %v234 = vld [vmem:[#allocation8 + $0x100] sm:$0xff]
    %v235 = vld [vmem:[#allocation8 + $0x108] sm:$0xff]
    %v236 = vld [vmem:[#allocation8 + $0x110] sm:$0xff]
    %v237 = vld [vmem:[#allocation8 + $0x118] sm:$0xff]
    %v238 = vld [vmem:[#allocation8 + $0x120] sm:$0xff]
    %v239 = vld [vmem:[#allocation8 + $0x128] sm:$0xff]
    %v240 = vld [vmem:[#allocation8 + $0x130] sm:$0xff]
    %v241 = vld [vmem:[#allocation8 + $0x138] sm:$0xff]
    %v242 = vld [vmem:[#allocation8 + $0x140] sm:$0xff]
    %v243 = vld [vmem:[#allocation8 + $0x148] sm:$0xff]
    %v244 = vld [vmem:[#allocation8 + $0x150] sm:$0xff]
    %v245 = vld [vmem:[#allocation8 + $0x158] sm:$0xff]
    %v246 = vld [vmem:[#allocation8 + $0x160] sm:$0xff]
    %v247 = vld [vmem:[#allocation8 + $0x168] sm:$0xff]
    %v248 = vld [vmem:[#allocation8 + $0x170] sm:$0xff]
    %v249 = vld [vmem:[#allocation8 + $0x178] sm:$0xff]
    %v250 = vld [vmem:[#allocation8 + $0x180] sm:$0xff]
    %v251 = vld [vmem:[#allocation8 + $0x188] sm:$0xff]
    %v252 = vld [vmem:[#allocation8 + $0x190] sm:$0xff]
    %v253 = vld [vmem:[#allocation8 + $0x198] sm:$0xff]
    %v254 = vld [vmem:[#allocation8 + $0x1a0] sm:$0xff]
    %v255 = vld [vmem:[#allocation8 + $0x1a8] sm:$0xff]
    %v256 = vld [vmem:[#allocation8 + $0x1b0] sm:$0xff]
    %v257 = vld [vmem:[#allocation8 + $0x1b8] sm:$0xff]
    %v258 = vld [vmem:[#allocation8 + $0x1c0] sm:$0xff]
    %v259 = vld [vmem:[#allocation8 + $0x1c8] sm:$0xff]
    %v260 = vld [vmem:[#allocation8 + $0x1d0] sm:$0xff]
    %v261 = vld [vmem:[#allocation8 + $0x1d8] sm:$0xff]
    %v262 = vld [vmem:[#allocation8 + $0x1e0] sm:$0xff]
    %v263 = vld [vmem:[#allocation8 + $0x1e8] sm:$0xff]
    %v264 = vld [vmem:[#allocation8 + $0x1f0] sm:$0xff]
    %v265 = vld [vmem:[#allocation8 + $0x1f8] sm:$0xff]
    %v266 = vld [vmem:[#allocation8 + $0x200] sm:$0xff]
    %v267 = vld [vmem:[#allocation8 + $0x208] sm:$0xff]
    %v268 = vld [vmem:[#allocation8 + $0x210] sm:$0xff]
    %v269 = vld [vmem:[#allocation8 + $0x218] sm:$0xff]
    %v270 = vld [vmem:[#allocation8 + $0x220] sm:$0xff]
    %v271 = vld [vmem:[#allocation8 + $0x228] sm:$0xff]
    %v272 = vld [vmem:[#allocation8 + $0x230] sm:$0xff]
    %v273 = vld [vmem:[#allocation8 + $0x238] sm:$0xff]
    %v274 = vld [vmem:[#allocation8 + $0x240] sm:$0xff]
    %v275 = vld [vmem:[#allocation8 + $0x248] sm:$0xff]
    %v276 = vld [vmem:[#allocation8 + $0x250] sm:$0xff]
    %v277 = vld [vmem:[#allocation8 + $0x258] sm:$0xff]
    %v278 = vld [vmem:[#allocation8 + $0x260] sm:$0xff]
    %v279 = vld [vmem:[#allocation8 + $0x268] sm:$0xff]
    %v280 = vld [vmem:[#allocation8 + $0x270] sm:$0xff]
    %v281 = vld [vmem:[#allocation8 + $0x278] sm:$0xff]
    %v282 = vld [vmem:[#allocation8 + $0x280] sm:$0xff]
    %v283 = vld [vmem:[#allocation8 + $0x288] sm:$0xff]
    %v284 = vld [vmem:[#allocation8 + $0x290] sm:$0xff]
    %v285 = vld [vmem:[#allocation8 + $0x298] sm:$0xff]
    %v286 = vld [vmem:[#allocation8 + $0x2a0] sm:$0xff]
    %v287 = vld [vmem:[#allocation8 + $0x2a8] sm:$0xff]
    %v288 = vld [vmem:[#allocation8 + $0x2b0] sm:$0xff]
    %v289 = vld [vmem:[#allocation8 + $0x2b8] sm:$0xff]
    %v290 = vld [vmem:[#allocation8 + $0x2c0] sm:$0xff]
    %v291 = vld [vmem:[#allocation8 + $0x2c8] sm:$0xff]
    %v292 = vld [vmem:[#allocation8 + $0x2d0] sm:$0xff]
    %v293 = vld [vmem:[#allocation8 + $0x2d8] sm:$0xff]
    %v294 = vld [vmem:[#allocation8 + $0x2e0] sm:$0xff]
    %v295 = vld [vmem:[#allocation8 + $0x2e8] sm:$0xff]
    %v296 = vld [vmem:[#allocation8 + $0x2f0] sm:$0xff]
    %v297 = vld [vmem:[#allocation8 + $0x2f8] sm:$0xff]
    %v298 = vld [vmem:[#allocation8 + $0x300] sm:$0xff]
    %v299 = vld [vmem:[#allocation8 + $0x308] sm:$0xff]
    %v300 = vld [vmem:[#allocation8 + $0x310] sm:$0xff]
    %v301 = vld [vmem:[#allocation8 + $0x318] sm:$0xff]
    %v302 = vld [vmem:[#allocation8 + $0x320] sm:$0xff]
    %v303 = vld [vmem:[#allocation8 + $0x328] sm:$0xff]
    %v304 = vld [vmem:[#allocation8 + $0x330] sm:$0xff]
    %v305 = vld [vmem:[#allocation8 + $0x338] sm:$0xff]
    %v306 = vld [vmem:[#allocation8 + $0x340] sm:$0xff]
    %v307 = vld [vmem:[#allocation8 + $0x348] sm:$0xff]
    %v308 = vld [vmem:[#allocation8 + $0x350] sm:$0xff]
    %v309 = vld [vmem:[#allocation8 + $0x358] sm:$0xff]
    %v310 = vld [vmem:[#allocation8 + $0x360] sm:$0xff]
    %v311 = vld [vmem:[#allocation8 + $0x368] sm:$0xff]
    %v312 = vld [vmem:[#allocation8 + $0x370] sm:$0xff]
    %v313 = vld [vmem:[#allocation8 + $0x378] sm:$0xff]
    %v314 = vld [vmem:[#allocation8 + $0x380] sm:$0xff]
    %v315 = vld [vmem:[#allocation8 + $0x388] sm:$0xff]
    %v316 = vld [vmem:[#allocation8 + $0x390] sm:$0xff]
    %v317 = vld [vmem:[#allocation8 + $0x398] sm:$0xff]
    %v318 = vld [vmem:[#allocation8 + $0x3a0] sm:$0xff]
    %v319 = vld [vmem:[#allocation8 + $0x3a8] sm:$0xff]
    %v320 = vld [vmem:[#allocation8 + $0x3b0] sm:$0xff]
    %v321 = vld [vmem:[#allocation8 + $0x3b8] sm:$0xff]
    %v322 = vld [vmem:[#allocation8 + $0x3c0] sm:$0xff]
    %v323 = vld [vmem:[#allocation8 + $0x3c8] sm:$0xff]
    %v324 = vld [vmem:[#allocation8 + $0x3d0] sm:$0xff]
    %v325 = vld [vmem:[#allocation8 + $0x3d8] sm:$0xff]
    %v326 = vld [vmem:[#allocation8 + $0x3e0] sm:$0xff]
    %v327 = vld [vmem:[#allocation8 + $0x3e8] sm:$0xff]
    %v328 = vld [vmem:[#allocation8 + $0x3f0] sm:$0xff]
    %v329 = vld [vmem:[#allocation8 + $0x3f8] sm:$0xff]
    %v330 = vld [vmem:[#allocation10] sm:$0xf]
    %v332 = vperm.slane %v330, 0
    %v333 = vperm.slane %v330, 1
    %v334 = vperm.slane %v330, 2
    %v335 = vperm.slane %v330, 3
    %340 = vmatpush.msra.mxu0 %v262
    %341 = vmatpush.msra.mxu0 %v258
    %342 = vmatpush.msra.mxu0 %v254
    %343 = vmatpush.msra.mxu0 %v250
    %344 = vmatpush.msra.mxu0 %v246
    %345 = vmatpush.msra.mxu0 %v242
    %346 = vmatpush.msra.mxu0 %v238
    %347 = vmatpush.msra.mxu0 %v234
    %348 = vmatpush.msra.mxu0 %v230
    %349 = vmatpush.msra.mxu0 %v226
    %350 = vmatpush.msra.mxu0 %v222
    %351 = vmatpush.msra.mxu0 %v218
    %352 = vmatpush.msra.mxu0 %v214
    %353 = vmatpush.msra.mxu0 %v210
    %354 = vmatpush.msra.mxu0 %v206
    %355 = vmatpush.msra.mxu0 %v202
    %356 = vmatmul.f32.gmra.mxu0 %v196
    %v357 = vpop.f32.mrf.mxu0
    %v358 = vadd.f32 %v332, %v357
    %359 = vmatmul.f32.gmra.mxu0 %v198
    %v360 = vpop.f32.mrf.mxu0
    %v361 = vadd.f32 %v332, %v360
    %362 = vmatmul.f32.gmra.mxu0 %v200
    %v363 = vpop.f32.mrf.mxu0
    %v364 = vadd.f32 %v332, %v363
    %365 = vdwg.mxu0
    %366 = vmatpush.msra.mxu0 %v326
    %367 = vmatpush.msra.mxu0 %v322
    %368 = vmatpush.msra.mxu0 %v318
    %369 = vmatpush.msra.mxu0 %v314
    %370 = vmatpush.msra.mxu0 %v310
    %371 = vmatpush.msra.mxu0 %v306
    %372 = vmatpush.msra.mxu0 %v302
    %373 = vmatpush.msra.mxu0 %v298
    %374 = vmatpush.msra.mxu0 %v294
    %375 = vmatpush.msra.mxu0 %v290
    %376 = vmatpush.msra.mxu0 %v286
    %377 = vmatpush.msra.mxu0 %v282
    %378 = vmatpush.msra.mxu0 %v278
    %379 = vmatpush.msra.mxu0 %v274
    %380 = vmatpush.msra.mxu0 %v270
    %381 = vmatpush.msra.mxu0 %v266
    %382 = vmatmul.f32.gmra.mxu0 %v197
    %v383 = vpop.f32.mrf.mxu0
    %v384 = vadd.f32 %v358, %v383
    %385 = vmatmul.f32.gmra.mxu0 %v199
    %v386 = vpop.f32.mrf.mxu0
    %v387 = vadd.f32 %v361, %v386
    %388 = vmatmul.f32.gmra.mxu0 %v201
    %v389 = vpop.f32.mrf.mxu0
    %v390 = vadd.f32 %v364, %v389
    %391 = vdwg.mxu0
    %392 = vmatpush.msra.mxu0 %v263
    %393 = vmatpush.msra.mxu0 %v259
    %394 = vmatpush.msra.mxu0 %v255
    %395 = vmatpush.msra.mxu0 %v251
    %396 = vmatpush.msra.mxu0 %v247
    %397 = vmatpush.msra.mxu0 %v243
    %398 = vmatpush.msra.mxu0 %v239
    %399 = vmatpush.msra.mxu0 %v235
    %400 = vmatpush.msra.mxu0 %v231
    %401 = vmatpush.msra.mxu0 %v227
    %402 = vmatpush.msra.mxu0 %v223
    %403 = vmatpush.msra.mxu0 %v219
    %404 = vmatpush.msra.mxu0 %v215
    %405 = vmatpush.msra.mxu0 %v211
    %406 = vmatpush.msra.mxu0 %v207
    %407 = vmatpush.msra.mxu0 %v203
    %408 = vmatmul.f32.gmra.mxu0 %v196
    %v409 = vpop.f32.mrf.mxu0
    %v410 = vadd.f32 %v333, %v409
    %411 = vmatmul.f32.gmra.mxu0 %v198
    %v412 = vpop.f32.mrf.mxu0
    %v413 = vadd.f32 %v333, %v412
    %414 = vmatmul.f32.gmra.mxu0 %v200
    %v415 = vpop.f32.mrf.mxu0
    %v416 = vadd.f32 %v333, %v415
    %417 = vdwg.mxu0
    %418 = vmatpush.msra.mxu0 %v327
    %419 = vmatpush.msra.mxu0 %v323
    %420 = vmatpush.msra.mxu0 %v319
    %421 = vmatpush.msra.mxu0 %v315
    %422 = vmatpush.msra.mxu0 %v311
    %423 = vmatpush.msra.mxu0 %v307
    %424 = vmatpush.msra.mxu0 %v303
    %425 = vmatpush.msra.mxu0 %v299
    %426 = vmatpush.msra.mxu0 %v295
    %427 = vmatpush.msra.mxu0 %v291
    %428 = vmatpush.msra.mxu0 %v287
    %429 = vmatpush.msra.mxu0 %v283
    %430 = vmatpush.msra.mxu0 %v279
    %431 = vmatpush.msra.mxu0 %v275
    %432 = vmatpush.msra.mxu0 %v271
    %433 = vmatpush.msra.mxu0 %v267
    %434 = vmatmul.f32.gmra.mxu0 %v197
    %v435 = vpop.f32.mrf.mxu0
    %v436 = vadd.f32 %v410, %v435
    %437 = vmatmul.f32.gmra.mxu0 %v199
    %v438 = vpop.f32.mrf.mxu0
    %v439 = vadd.f32 %v413, %v438
    %440 = vmatmul.f32.gmra.mxu0 %v201
    %v441 = vpop.f32.mrf.mxu0
    %v442 = vadd.f32 %v416, %v441
    %443 = vdwg.mxu0
    %444 = vmatpush.msra.mxu0 %v264
    %445 = vmatpush.msra.mxu0 %v260
    %446 = vmatpush.msra.mxu0 %v256
    %447 = vmatpush.msra.mxu0 %v252
    %448 = vmatpush.msra.mxu0 %v248
    %449 = vmatpush.msra.mxu0 %v244
    %450 = vmatpush.msra.mxu0 %v240
    %451 = vmatpush.msra.mxu0 %v236
    %452 = vmatpush.msra.mxu0 %v232
    %453 = vmatpush.msra.mxu0 %v228
    %454 = vmatpush.msra.mxu0 %v224
    %455 = vmatpush.msra.mxu0 %v220
    %456 = vmatpush.msra.mxu0 %v216
    %457 = vmatpush.msra.mxu0 %v212
    %458 = vmatpush.msra.mxu0 %v208
    %459 = vmatpush.msra.mxu0 %v204
    %460 = vmatmul.f32.gmra.mxu0 %v196
    %v461 = vpop.f32.mrf.mxu0
    %v462 = vadd.f32 %v334, %v461
    %463 = vmatmul.f32.gmra.mxu0 %v198
    %v464 = vpop.f32.mrf.mxu0
    %v465 = vadd.f32 %v334, %v464
    %466 = vmatmul.f32.gmra.mxu0 %v200
    %v467 = vpop.f32.mrf.mxu0
    %v468 = vadd.f32 %v334, %v467
    %469 = vdwg.mxu0
    %470 = vmatpush.msra.mxu0 %v328
    %471 = vmatpush.msra.mxu0 %v324
    %472 = vmatpush.msra.mxu0 %v320
    %473 = vmatpush.msra.mxu0 %v316
    %474 = vmatpush.msra.mxu0 %v312
    %475 = vmatpush.msra.mxu0 %v308
    %476 = vmatpush.msra.mxu0 %v304
    %477 = vmatpush.msra.mxu0 %v300
    %478 = vmatpush.msra.mxu0 %v296
    %479 = vmatpush.msra.mxu0 %v292
    %480 = vmatpush.msra.mxu0 %v288
    %481 = vmatpush.msra.mxu0 %v284
    %482 = vmatpush.msra.mxu0 %v280
    %483 = vmatpush.msra.mxu0 %v276
    %484 = vmatpush.msra.mxu0 %v272
    %485 = vmatpush.msra.mxu0 %v268
    %486 = vmatmul.f32.gmra.mxu0 %v197
    %v487 = vpop.f32.mrf.mxu0
    %v488 = vadd.f32 %v462, %v487
    %489 = vmatmul.f32.gmra.mxu0 %v199
    %v490 = vpop.f32.mrf.mxu0
    %v491 = vadd.f32 %v465, %v490
    %492 = vmatmul.f32.gmra.mxu0 %v201
    %v493 = vpop.f32.mrf.mxu0
    %v494 = vadd.f32 %v468, %v493
    %495 = vdwg.mxu0
    %496 = vmatpush.msra.mxu0 %v265
    %497 = vmatpush.msra.mxu0 %v261
    %498 = vmatpush.msra.mxu0 %v257
    %499 = vmatpush.msra.mxu0 %v253
    %500 = vmatpush.msra.mxu0 %v249
    %501 = vmatpush.msra.mxu0 %v245
    %502 = vmatpush.msra.mxu0 %v241
    %503 = vmatpush.msra.mxu0 %v237
    %504 = vmatpush.msra.mxu0 %v233
    %505 = vmatpush.msra.mxu0 %v229
    %506 = vmatpush.msra.mxu0 %v225
    %507 = vmatpush.msra.mxu0 %v221
    %508 = vmatpush.msra.mxu0 %v217
    %509 = vmatpush.msra.mxu0 %v213
    %510 = vmatpush.msra.mxu0 %v209
    %511 = vmatpush.msra.mxu0 %v205
    %512 = vmatmul.f32.gmra.mxu0 %v196
    %v513 = vpop.f32.mrf.mxu0
    %v514 = vadd.f32 %v335, %v513
    %515 = vmatmul.f32.gmra.mxu0 %v198
    %v516 = vpop.f32.mrf.mxu0
    %v517 = vadd.f32 %v335, %v516
    %518 = vmatmul.f32.gmra.mxu0 %v200
    %v519 = vpop.f32.mrf.mxu0
    %v520 = vadd.f32 %v335, %v519
    %521 = vdwg.mxu0
    %522 = vmatpush.msra.mxu0 %v329
    %523 = vmatpush.msra.mxu0 %v325
    %524 = vmatpush.msra.mxu0 %v321
    %525 = vmatpush.msra.mxu0 %v317
    %526 = vmatpush.msra.mxu0 %v313
    %527 = vmatpush.msra.mxu0 %v309
    %528 = vmatpush.msra.mxu0 %v305
    %529 = vmatpush.msra.mxu0 %v301
    %530 = vmatpush.msra.mxu0 %v297
    %531 = vmatpush.msra.mxu0 %v293
    %532 = vmatpush.msra.mxu0 %v289
    %533 = vmatpush.msra.mxu0 %v285
    %534 = vmatpush.msra.mxu0 %v281
    %535 = vmatpush.msra.mxu0 %v277
    %536 = vmatpush.msra.mxu0 %v273
    %537 = vmatpush.msra.mxu0 %v269
    %538 = vmatmul.f32.gmra.mxu0 %v197
    %v539 = vpop.f32.mrf.mxu0
    %v540 = vadd.f32 %v514, %v539
    %541 = vmatmul.f32.gmra.mxu0 %v199
    %v542 = vpop.f32.mrf.mxu0
    %v543 = vadd.f32 %v517, %v542
    %544 = vmatmul.f32.gmra.mxu0 %v201
    %v545 = vpop.f32.mrf.mxu0
    %v546 = vadd.f32 %v520, %v545
    %547 = vdwg.mxu0
    %v548 = vmax.f32 %v384, 0.0
    %v549 = vmax.f32 %v436, 0.0
    %v550 = vmax.f32 %v488, 0.0
    %v551 = vmax.f32 %v540, 0.0
    %v552 = vmax.f32 %v387, 0.0
    %v553 = vmax.f32 %v439, 0.0
    %v554 = vmax.f32 %v491, 0.0
    %v555 = vmax.f32 %v543, 0.0
    %v556 = vmax.f32 %v390, 0.0
    %v557 = vmax.f32 %v442, 0.0
    %v558 = vmax.f32 %v494, 0.0
    %v559 = vmax.f32 %v546, 0.0
    %v560 = vld [vmem:[#allocation11] sm:$0xff]
    %v561 = vld [vmem:[#allocation11 + $0x8] sm:$0xff]
    %v562 = vld [vmem:[#allocation11 + $0x10] sm:$0xff]
    %v563 = vld [vmem:[#allocation11 + $0x18] sm:$0xff]
    %v564 = vld [vmem:[#allocation11 + $0x20] sm:$0xff]
    %v565 = vld [vmem:[#allocation11 + $0x28] sm:$0xff]
    %v566 = vld [vmem:[#allocation11 + $0x30] sm:$0xff]
    %v567 = vld [vmem:[#allocation11 + $0x38] sm:$0xff]
    %v568 = vld [vmem:[#allocation11 + $0x40] sm:$0xff]
    %v569 = vld [vmem:[#allocation11 + $0x48] sm:$0xff]
    %v570 = vld [vmem:[#allocation11 + $0x50] sm:$0xff]
    %v571 = vld [vmem:[#allocation11 + $0x58] sm:$0xff]
    %v572 = vld [vmem:[#allocation11 + $0x60] sm:$0xff]
    %v573 = vld [vmem:[#allocation11 + $0x68] sm:$0xff]
    %v574 = vld [vmem:[#allocation11 + $0x70] sm:$0xff]
    %v575 = vld [vmem:[#allocation11 + $0x78] sm:$0xff]
    %v576 = vld [vmem:[#allocation11 + $0x80] sm:$0xff]
    %v577 = vld [vmem:[#allocation11 + $0x88] sm:$0xff]
    %v578 = vld [vmem:[#allocation11 + $0x90] sm:$0xff]
    %v579 = vld [vmem:[#allocation11 + $0x98] sm:$0xff]
    %v580 = vld [vmem:[#allocation11 + $0xa0] sm:$0xff]
    %v581 = vld [vmem:[#allocation11 + $0xa8] sm:$0xff]
    %v582 = vld [vmem:[#allocation11 + $0xb0] sm:$0xff]
    %v583 = vld [vmem:[#allocation11 + $0xb8] sm:$0xff]
    %v584 = vld [vmem:[#allocation11 + $0xc0] sm:$0xff]
    %v585 = vld [vmem:[#allocation11 + $0xc8] sm:$0xff]
    %v586 = vld [vmem:[#allocation11 + $0xd0] sm:$0xff]
    %v587 = vld [vmem:[#allocation11 + $0xd8] sm:$0xff]
    %v588 = vld [vmem:[#allocation11 + $0xe0] sm:$0xff]
    %v589 = vld [vmem:[#allocation11 + $0xe8] sm:$0xff]
    %v590 = vld [vmem:[#allocation11 + $0xf0] sm:$0xff]
    %v591 = vld [vmem:[#allocation11 + $0xf8] sm:$0xff]
    %v592 = vld [vmem:[#allocation11 + $0x100] sm:$0xff]
    %v593 = vld [vmem:[#allocation11 + $0x108] sm:$0xff]
    %v594 = vld [vmem:[#allocation11 + $0x110] sm:$0xff]
    %v595 = vld [vmem:[#allocation11 + $0x118] sm:$0xff]
    %v596 = vld [vmem:[#allocation11 + $0x120] sm:$0xff]
    %v597 = vld [vmem:[#allocation11 + $0x128] sm:$0xff]
    %v598 = vld [vmem:[#allocation11 + $0x130] sm:$0xff]
    %v599 = vld [vmem:[#allocation11 + $0x138] sm:$0xff]
    %v600 = vld [vmem:[#allocation11 + $0x140] sm:$0xff]
    %v601 = vld [vmem:[#allocation11 + $0x148] sm:$0xff]
    %v602 = vld [vmem:[#allocation11 + $0x150] sm:$0xff]
    %v603 = vld [vmem:[#allocation11 + $0x158] sm:$0xff]
    %v604 = vld [vmem:[#allocation11 + $0x160] sm:$0xff]
    %v605 = vld [vmem:[#allocation11 + $0x168] sm:$0xff]
    %v606 = vld [vmem:[#allocation11 + $0x170] sm:$0xff]
    %v607 = vld [vmem:[#allocation11 + $0x178] sm:$0xff]
    %v608 = vld [vmem:[#allocation11 + $0x180] sm:$0xff]
    %v609 = vld [vmem:[#allocation11 + $0x188] sm:$0xff]
    %v610 = vld [vmem:[#allocation11 + $0x190] sm:$0xff]
    %v611 = vld [vmem:[#allocation11 + $0x198] sm:$0xff]
    %v612 = vld [vmem:[#allocation11 + $0x1a0] sm:$0xff]
    %v613 = vld [vmem:[#allocation11 + $0x1a8] sm:$0xff]
    %v614 = vld [vmem:[#allocation11 + $0x1b0] sm:$0xff]
    %v615 = vld [vmem:[#allocation11 + $0x1b8] sm:$0xff]
    %v616 = vld [vmem:[#allocation11 + $0x1c0] sm:$0xff]
    %v617 = vld [vmem:[#allocation11 + $0x1c8] sm:$0xff]
    %v618 = vld [vmem:[#allocation11 + $0x1d0] sm:$0xff]
    %v619 = vld [vmem:[#allocation11 + $0x1d8] sm:$0xff]
    %v620 = vld [vmem:[#allocation11 + $0x1e0] sm:$0xff]
    %v621 = vld [vmem:[#allocation11 + $0x1e8] sm:$0xff]
    %v622 = vld [vmem:[#allocation11 + $0x1f0] sm:$0xff]
    %v623 = vld [vmem:[#allocation11 + $0x1f8] sm:$0xff]
    %v624 = vld [vmem:[%s6] sm:$0x1]
    %v626 = vperm.slane %v624, 0
    %628 = vmatpush.msra.mxu0 %v575
    %629 = vmatpush.msra.mxu0 %v574
    %630 = vmatpush.msra.mxu0 %v573
    %631 = vmatpush.msra.mxu0 %v572
    %632 = vmatpush.msra.mxu0 %v571
    %633 = vmatpush.msra.mxu0 %v570
    %634 = vmatpush.msra.mxu0 %v569
    %635 = vmatpush.msra.mxu0 %v568
    %636 = vmatpush.msra.mxu0 %v567
    %637 = vmatpush.msra.mxu0 %v566
    %638 = vmatpush.msra.mxu0 %v565
    %639 = vmatpush.msra.mxu0 %v564
    %640 = vmatpush.msra.mxu0 %v563
    %641 = vmatpush.msra.mxu0 %v562
    %642 = vmatpush.msra.mxu0 %v561
    %643 = vmatpush.msra.mxu0 %v560
    %644 = vmatmul.f32.gmra.mxu0 %v548
    %v645 = vpop.f32.mrf.mxu0
    %v646 = vadd.f32 %v626, %v645
    %647 = vmatmul.f32.gmra.mxu0 %v552
    %v648 = vpop.f32.mrf.mxu0
    %v649 = vadd.f32 %v626, %v648
    %650 = vmatmul.f32.gmra.mxu0 %v556
    %v651 = vpop.f32.mrf.mxu0
    %v652 = vadd.f32 %v626, %v651
    %653 = vdwg.mxu0
    %654 = vmatpush.msra.mxu0 %v591
    %655 = vmatpush.msra.mxu0 %v590
    %656 = vmatpush.msra.mxu0 %v589
    %657 = vmatpush.msra.mxu0 %v588
    %658 = vmatpush.msra.mxu0 %v587
    %659 = vmatpush.msra.mxu0 %v586
    %660 = vmatpush.msra.mxu0 %v585
    %661 = vmatpush.msra.mxu0 %v584
    %662 = vmatpush.msra.mxu0 %v583
    %663 = vmatpush.msra.mxu0 %v582
    %664 = vmatpush.msra.mxu0 %v581
    %665 = vmatpush.msra.mxu0 %v580
    %666 = vmatpush.msra.mxu0 %v579
    %667 = vmatpush.msra.mxu0 %v578
    %668 = vmatpush.msra.mxu0 %v577
    %669 = vmatpush.msra.mxu0 %v576
    %670 = vmatmul.f32.gmra.mxu0 %v549
    %v671 = vpop.f32.mrf.mxu0
    %v672 = vadd.f32 %v646, %v671
    %673 = vmatmul.f32.gmra.mxu0 %v553
    %v674 = vpop.f32.mrf.mxu0
    %v675 = vadd.f32 %v649, %v674
    %676 = vmatmul.f32.gmra.mxu0 %v557
    %v677 = vpop.f32.mrf.mxu0
    %v678 = vadd.f32 %v652, %v677
    %679 = vdwg.mxu0
    %680 = vmatpush.msra.mxu0 %v607
    %681 = vmatpush.msra.mxu0 %v606
    %682 = vmatpush.msra.mxu0 %v605
    %683 = vmatpush.msra.mxu0 %v604
    %684 = vmatpush.msra.mxu0 %v603
    %685 = vmatpush.msra.mxu0 %v602
    %686 = vmatpush.msra.mxu0 %v601
    %687 = vmatpush.msra.mxu0 %v600
    %688 = vmatpush.msra.mxu0 %v599
    %689 = vmatpush.msra.mxu0 %v598
    %690 = vmatpush.msra.mxu0 %v597
    %691 = vmatpush.msra.mxu0 %v596
    %692 = vmatpush.msra.mxu0 %v595
    %693 = vmatpush.msra.mxu0 %v594
    %694 = vmatpush.msra.mxu0 %v593
    %695 = vmatpush.msra.mxu0 %v592
    %696 = vmatmul.f32.gmra.mxu0 %v550
    %v697 = vpop.f32.mrf.mxu0
    %v698 = vadd.f32 %v672, %v697
    %699 = vmatmul.f32.gmra.mxu0 %v554
    %v700 = vpop.f32.mrf.mxu0
    %v701 = vadd.f32 %v675, %v700
    %702 = vmatmul.f32.gmra.mxu0 %v558
    %v703 = vpop.f32.mrf.mxu0
    %v704 = vadd.f32 %v678, %v703
    %705 = vdwg.mxu0
    %706 = vmatpush.msra.mxu0 %v623
    %707 = vmatpush.msra.mxu0 %v622
    %708 = vmatpush.msra.mxu0 %v621
    %709 = vmatpush.msra.mxu0 %v620
    %710 = vmatpush.msra.mxu0 %v619
    %711 = vmatpush.msra.mxu0 %v618
    %712 = vmatpush.msra.mxu0 %v617
    %713 = vmatpush.msra.mxu0 %v616
    %714 = vmatpush.msra.mxu0 %v615
    %715 = vmatpush.msra.mxu0 %v614
    %716 = vmatpush.msra.mxu0 %v613
    %717 = vmatpush.msra.mxu0 %v612
    %718 = vmatpush.msra.mxu0 %v611
    %719 = vmatpush.msra.mxu0 %v610
    %720 = vmatpush.msra.mxu0 %v609
    %721 = vmatpush.msra.mxu0 %v608
    %722 = vmatmul.f32.gmra.mxu0 %v551
    %v723 = vpop.f32.mrf.mxu0
    %v724 = vadd.f32 %v698, %v723
    %725 = vmatmul.f32.gmra.mxu0 %v555
    %v726 = vpop.f32.mrf.mxu0
    %v727 = vadd.f32 %v701, %v726
    %728 = vmatmul.f32.gmra.mxu0 %v559
    %v729 = vpop.f32.mrf.mxu0
    %v730 = vadd.f32 %v704, %v729
    %731 = vdwg.mxu0
    %v732 = vxor.u32 %v724, 2147483648
    %v733 = vxor.u32 %v727, 2147483648
    %v734 = vxor.u32 %v730, 2147483648
    %v735 = vmul.f32 %v732, 1.442695
    %v736 = vpow.pop %v735
    %v737 = vmul.f32 %v733, 1.442695
    %v738 = vpow.pop %v737
    %v739 = vmul.f32 %v734, 1.442695
    %v740 = vpow.pop %v739
    %v741 = vadd.f32 %v736, 1.0
    %v742 = vadd.f32 %v738, 1.0
    %v743 = vadd.f32 %v740, 1.0
    %v744 = vrcp.pop %v741
    %v745 = vmul.f32 %v741, %v744
    %v746 = vsub.f32 1.0, %v745
    %v747 = vmul.f32 %v744, %v746
    %v748 = vadd.f32 %v744, %v747
    %vm749 = vweird.f32 %v741
    %vm750 = vweird.f32 %v744
    %vm751 = vmor %vm749, %vm750
    %v752 = vsel %vm751, %v744, %v748
    %v753 = vand.u32 2147483647, %v741
    %vm754 = vcmp.eq.f32.partialorder %v753, 8.507059e+37
    %v755 = vand.u32 %v741, 2147483648
    %v756 = vor.u32 1.1754944e-38, %v755
    %v757 = vsel %vm754, %v756, %v752
    %v758 = vmul.f32 1.0, %v757
    %v759 = vrcp.pop %v742
    %v760 = vmul.f32 %v742, %v759
    %v761 = vsub.f32 1.0, %v760
    %v762 = vmul.f32 %v759, %v761
    %v763 = vadd.f32 %v759, %v762
    %vm764 = vweird.f32 %v742
    %vm765 = vweird.f32 %v759
    %vm766 = vmor %vm764, %vm765
    %v767 = vsel %vm766, %v759, %v763
    %v768 = vand.u32 2147483647, %v742
    %vm769 = vcmp.eq.f32.partialorder %v768, 8.507059e+37
    %v770 = vand.u32 %v742, 2147483648
    %v771 = vor.u32 1.1754944e-38, %v770
    %v772 = vsel %vm769, %v771, %v767
    %v773 = vmul.f32 1.0, %v772
    %v774 = vrcp.pop %v743
    %v775 = vmul.f32 %v743, %v774
    %v776 = vsub.f32 1.0, %v775
    %v777 = vmul.f32 %v774, %v776
    %v778 = vadd.f32 %v774, %v777
    %vm779 = vweird.f32 %v743
    %vm780 = vweird.f32 %v774
    %vm781 = vmor %vm779, %vm780
    %v782 = vsel %vm781, %v774, %v778
    %v783 = vand.u32 2147483647, %v743
    %vm784 = vcmp.eq.f32.partialorder %v783, 8.507059e+37
    %v785 = vand.u32 %v743, 2147483648
    %v786 = vor.u32 1.1754944e-38, %v785
    %v787 = vsel %vm784, %v786, %v782
    %v788 = vmul.f32 1.0, %v787
    %789 = vst [vmem:[#allocation13] sm:$0xff] %v758
    %790 = vst [vmem:[#allocation13 + $0x8] sm:$0xff] %v773
    %791 = vst [vmem:[#allocation13 + $0x10] sm:$0xff] %v788
    // Predicated region
    $region54: #{tpu_custom_call.1} parent=1 // pred_check
      _
    $region55: #{tpu_custom_call.1} parent=1 // pred_check_branch
      %793 = sbr.rel (0) target = $region57
    $region56: #{tpu_custom_call.1} parent=1 // pred_region
      %795 = vsyncadd [#allocation4], 0
      %s796 = sshll.u32 [#allocation13], 4
      %s797 = int_to_ptr.vmem [resolvable:$true] %s796
      %s798 = sshll.u32 %s7, 4
      %s799 = int_to_ptr.hbm [resolvable:$true] %s798
      %804 = dma.vmem_to_hbm [thread:$0]  %s797, 384, %s799, [#allocation4], 128, 128, 8
    $region57: #{tpu_custom_call.1} parent=1 // pred_fallthru
      _
    // Predicated region
    $region58: #{tpu_custom_call.1} parent=1 // pred_check
      _
    $region59: #{tpu_custom_call.1} parent=1 // pred_check_branch
      %806 = sbr.rel (0) target = $region61
    $region60: #{tpu_custom_call.1} parent=1 // pred_region
      %808 = dma.done [#allocation4], 384
    $region61: #{tpu_custom_call.1} parent=1 // pred_fallthru
      _
    %809 = vsyncpa [#allocation3], 1
    %810 = vsyncpa [#allocation6], 1
    %811 = vsyncpa [#allocation9], 1
    %812 = vsyncpa [#allocation12], 1
    %813 = vsyncpa [#allocation4], 1

// kernel: tpu_custom_call.1
$region0: #{tpu_custom_call.1}
  #allocation0 [shape = 'u32[]', space=smem, size = 0x4, offset = 0x4, fixed_abs, tag = 'smem constant byte address 0x4 - core index']
  #allocation1 [shape = 'u32[72,128]{1,0:T(1,128)}', space=vmem, size = 0x9000, scoped, tag = 'internal scratch']
  %s0 = inlined_call_operand.hbm [shape: f32[24,32], index: 0, kind: input, shape index: {}]
  %s1 = inlined_call_operand.hbm [shape: f32[32,256], index: 1, kind: input, shape index: {}]
  %s2 = inlined_call_operand.hbm [shape: f32[1,256], index: 2, kind: input, shape index: {}]
  %s3 = inlined_call_operand.hbm [shape: f32[256,512], index: 3, kind: input, shape index: {}]
  %s4 = inlined_call_operand.hbm [shape: f32[1,512], index: 4, kind: input, shape index: {}]
  %s5 = inlined_call_operand.hbm [shape: f32[512,128], index: 5, kind: input, shape index: {}]
  %s6 = inlined_call_operand.vmem [shape: f32[1,128], index: 6, kind: input, shape index: {}]
  %s7 = inlined_call_operand.hbm [shape: f32[24,128], index: 7, kind: output, shape index: {}]
  %s8 = sld [smem:[#allocation0]]
  $region62: #{tpu_custom_call.1} parent=0
    _
  %s10 = ssub.s32 1, %s8
  %s11 = scalar_select 0, %s10, %s8
  $region1: #{tpu_custom_call.1} parent=0
    #allocation2 [shape = 'u8[12288]{0}', space=vmem, size = 0x3000, scoped, tag = 'input window, operand 0, single buffered']
    #allocation3 [shape = 's32[1]{0}', space=sflag, size = 0x4, scoped, tag = 'scoped memory for tpu_custom_call.1']
    #allocation4 [shape = 's32[1]{0}', space=sflag, size = 0x4, scoped, tag = 'scoped memory for tpu_custom_call.1']
    #allocation5 [shape = 'u8[32768]{0}', space=vmem, size = 0x8000, scoped, tag = 'input window, operand 1, single buffered']
    #allocation6 [shape = 's32[1]{0}', space=sflag, size = 0x4, scoped, tag = 'scoped memory for tpu_custom_call.1']
    #allocation7 [shape = 'u8[1024]{0}', space=vmem, size = 0x400, scoped, tag = 'input window, operand 2, single buffered']
    #allocation8 [shape = 'u8[524288]{0}', space=vmem, size = 0x80000, scoped, tag = 'input window, operand 3, single buffered']
    #allocation9 [shape = 's32[1]{0}', space=sflag, size = 0x4, scoped, tag = 'scoped memory for tpu_custom_call.1']
    #allocation10 [shape = 'u8[2048]{0}', space=vmem, size = 0x800, scoped, tag = 'input window, operand 4, single buffered']
    #allocation11 [shape = 'u8[262144]{0}', space=vmem, size = 0x40000, scoped, tag = 'input window, operand 5, single buffered']
    #allocation12 [shape = 's32[1]{0}', space=sflag, size = 0x4, scoped, tag = 'scoped memory for tpu_custom_call.1']
    #allocation13 [shape = 'u8[12288]{0}', space=vmem, size = 0x3000, scoped, tag = 'output window, operand 0, single buffered']
    %12 = vsyncpa [#allocation3], 0
    %13 = vsyncpa [#allocation6], 0
    %14 = vsyncpa [#allocation9], 0
    %15 = vsyncpa [#allocation12], 0
    %16 = vsyncpa [#allocation4], 0
    // Predicated region
    $region2: #{tpu_custom_call.1} parent=1 // pred_check
      _
    $region3: #{tpu_custom_call.1} parent=1 // pred_check_branch
      %18 = sbr.rel (0) target = $region5
    $region4: #{tpu_custom_call.1} parent=1 // pred_region
      %20 = vsyncadd [#allocation3], 0
      %s21 = sshll.u32 %s0, 4
      %s22 = int_to_ptr.hbm [resolvable:$true] %s21
      %s23 = sshll.u32 [#allocation2], 4
      %s24 = int_to_ptr.vmem [resolvable:$true] %s23
      %29 = dma.hbm_to_vmem [thread:$0]  %s22, 384, %s24, [#allocation3], 128, 128, 8
    $region5: #{tpu_custom_call.1} parent=1 // pred_fallthru
      _
    // Predicated region
    $region6: #{tpu_custom_call.1} parent=1 // pred_check
      _
    $region7: #{tpu_custom_call.1} parent=1 // pred_check_branch
      %31 = sbr.rel (0) target = $region9
    $region8: #{tpu_custom_call.1} parent=1 // pred_region
      %33 = vsyncadd [#allocation6], 0
      %s34 = sshll.u32 %s1, 4
      %s35 = int_to_ptr.hbm [resolvable:$true] %s34
      %s36 = sshll.u32 [#allocation5], 4
      %s37 = int_to_ptr.vmem [resolvable:$true] %s36
      %42 = dma.hbm_to_vmem [thread:$0]  %s35, 1024, %s37, [#allocation6], 256, 256, 16
    $region9: #{tpu_custom_call.1} parent=1 // pred_fallthru
      _
    // Predicated region
    $region10: #{tpu_custom_call.1} parent=1 // pred_check
      _
    $region11: #{tpu_custom_call.1} parent=1 // pred_check_branch
      %44 = sbr.rel (0) target = $region13
    $region12: #{tpu_custom_call.1} parent=1 // pred_region
      %46 = vsyncadd [#allocation6], 0
      %s48 = sshll.u32 %s2, 4
      %s49 = int_to_ptr.hbm [resolvable:$true] %s48
      %s50 = sshll.u32 [#allocation7], 4
      %s51 = int_to_ptr.vmem [resolvable:$true] %s50
      %53 = dma.hbm_to_vmem [thread:$0]  %s49, 32, %s51, [#allocation6]
    $region13: #{tpu_custom_call.1} parent=1 // pred_fallthru
      _
    // Predicated region
    $region14: #{tpu_custom_call.1} parent=1 // pred_check
      _
    $region15: #{tpu_custom_call.1} parent=1 // pred_check_branch
      %55 = sbr.rel (0) target = $region17
    $region16: #{tpu_custom_call.1} parent=1 // pred_region
      %57 = vsyncadd [#allocation9], 0
      %s58 = sshll.u32 %s3, 4
      %s59 = int_to_ptr.hbm [resolvable:$true] %s58
      %s60 = sshll.u32 [#allocation8], 4
      %s61 = int_to_ptr.vmem [resolvable:$true] %s60
      %66 = dma.hbm_to_vmem [thread:$0]  %s59, 16384, %s61, [#allocation9], 512, 512, 32
    $region17: #{tpu_custom_call.1} parent=1 // pred_fallthru
      _
    // Predicated region
    $region18: #{tpu_custom_call.1} parent=1 // pred_check
      _
    $region19: #{tpu_custom_call.1} parent=1 // pred_check_branch
      %68 = sbr.rel (0) target = $region21
    $region20: #{tpu_custom_call.1} parent=1 // pred_region
      %70 = vsyncadd [#allocation9], 0
      %s72 = sshll.u32 %s4, 4
      %s73 = int_to_ptr.hbm [resolvable:$true] %s72
      %s74 = sshll.u32 [#allocation10], 4
      %s75 = int_to_ptr.vmem [resolvable:$true] %s74
      %77 = dma.hbm_to_vmem [thread:$0]  %s73, 64, %s75, [#allocation9]
    $region21: #{tpu_custom_call.1} parent=1 // pred_fallthru
      _
    // Predicated region
    $region22: #{tpu_custom_call.1} parent=1 // pred_check
      _
    $region23: #{tpu_custom_call.1} parent=1 // pred_check_branch
      %79 = sbr.rel (0) target = $region25
    $region24: #{tpu_custom_call.1} parent=1 // pred_region
      %81 = vsyncadd [#allocation12], 0
      %s82 = sshll.u32 %s5, 4
      %s83 = int_to_ptr.hbm [resolvable:$true] %s82
      %s84 = sshll.u32 [#allocation11], 4
      %s85 = int_to_ptr.vmem [resolvable:$true] %s84
      %90 = dma.hbm_to_vmem [thread:$0]  %s83, 8192, %s85, [#allocation12], 128, 128, 8
    $region25: #{tpu_custom_call.1} parent=1 // pred_fallthru
      _
    // Predicated region
    $region26: #{tpu_custom_call.1} parent=1 // pred_check
      _
    $region27: #{tpu_custom_call.1} parent=1 // pred_check_branch
      %92 = sbr.rel (0) target = $region29
    $region28: #{tpu_custom_call.1} parent=1 // pred_region
      _
    $region29: #{tpu_custom_call.1} parent=1 // pred_fallthru
      _
    // Predicated region
    $region30: #{tpu_custom_call.1} parent=1 // pred_check
      _
    $region31: #{tpu_custom_call.1} parent=1 // pred_check_branch
      %94 = sbr.rel (0) target = $region33
    $region32: #{tpu_custom_call.1} parent=1 // pred_region
      %96 = dma.done [#allocation3], 384
    $region33: #{tpu_custom_call.1} parent=1 // pred_fallthru
      _
    // Predicated region
    $region34: #{tpu_custom_call.1} parent=1 // pred_check
      _
    $region35: #{tpu_custom_call.1} parent=1 // pred_check_branch
      %98 = sbr.rel (0) target = $region37
    $region36: #{tpu_custom_call.1} parent=1 // pred_region
      %100 = dma.done [#allocation6], 1024
    $region37: #{tpu_custom_call.1} parent=1 // pred_fallthru
      _
    // Predicated region
    $region38: #{tpu_custom_call.1} parent=1 // pred_check
      _
    $region39: #{tpu_custom_call.1} parent=1 // pred_check_branch
      %102 = sbr.rel (0) target = $region41
    $region40: #{tpu_custom_call.1} parent=1 // pred_region
      %104 = dma.done [#allocation6], 32
    $region41: #{tpu_custom_call.1} parent=1 // pred_fallthru
      _
    // Predicated region
    $region42: #{tpu_custom_call.1} parent=1 // pred_check
      _
    $region43: #{tpu_custom_call.1} parent=1 // pred_check_branch
      %106 = sbr.rel (0) target = $region45
    $region44: #{tpu_custom_call.1} parent=1 // pred_region
      %108 = dma.done [#allocation9], 16384
    $region45: #{tpu_custom_call.1} parent=1 // pred_fallthru
      _
    // Predicated region
    $region46: #{tpu_custom_call.1} parent=1 // pred_check
      _
    $region47: #{tpu_custom_call.1} parent=1 // pred_check_branch
      %110 = sbr.rel (0) target = $region49
    $region48: #{tpu_custom_call.1} parent=1 // pred_region
      %112 = dma.done [#allocation9], 64
    $region49: #{tpu_custom_call.1} parent=1 // pred_fallthru
      _
    // Predicated region
    $region50: #{tpu_custom_call.1} parent=1 // pred_check
      _
    $region51: #{tpu_custom_call.1} parent=1 // pred_check_branch
      %114 = sbr.rel (0) target = $region53
    $region52: #{tpu_custom_call.1} parent=1 // pred_region
      %116 = dma.done [#allocation12], 8192
    $region53: #{tpu_custom_call.1} parent=1 // pred_fallthru
      _
    %v117 = vld [vmem:[#allocation2] sm:$0xff]
    %v118 = vld [vmem:[#allocation2 + $0x8] sm:$0xff]
    %v119 = vld [vmem:[#allocation2 + $0x10] sm:$0xff]
    %v120 = vld [vmem:[#allocation5] sm:$0xff]
    %v121 = vld [vmem:[#allocation5 + $0x8] sm:$0xff]
    %v122 = vld [vmem:[#allocation5 + $0x10] sm:$0xff]
    %v123 = vld [vmem:[#allocation5 + $0x18] sm:$0xff]
    %v124 = vld [vmem:[#allocation5 + $0x20] sm:$0xff]
    %v125 = vld [vmem:[#allocation5 + $0x28] sm:$0xff]
    %v126 = vld [vmem:[#allocation5 + $0x30] sm:$0xff]
    %v127 = vld [vmem:[#allocation5 + $0x38] sm:$0xff]
    %v128 = vld [vmem:[#allocation7] sm:$0x3]
    %v130 = vperm.slane %v128, 0
    %v131 = vperm.slane %v128, 1
    %vm134 = vcmask 261120
    %v136 = vsel %vm134, %v117, 0
    %v139 = vsel %vm134, %v118, 0
    %v142 = vsel %vm134, %v119, 0
    %144 = vmatpush.msra.mxu0 0.0
    %145 = vmatpush.msra.mxu0 0.0
    %146 = vmatpush.msra.mxu0 0.0
    %147 = vmatpush.msra.mxu0 0.0
    %148 = vmatpush.msra.mxu0 0.0
    %149 = vmatpush.msra.mxu0 0.0
    %150 = vmatpush.msra.mxu0 0.0
    %151 = vmatpush.msra.mxu0 0.0
    %152 = vmatpush.msra.mxu0 0.0
    %153 = vmatpush.msra.mxu0 0.0
    %154 = vmatpush.msra.mxu0 0.0
    %155 = vmatpush.msra.mxu0 0.0
    %156 = vmatpush.msra.mxu0 %v126
    %157 = vmatpush.msra.mxu0 %v124
    %158 = vmatpush.msra.mxu0 %v122
    %159 = vmatpush.msra.mxu0 %v120
    %160 = vmatmul.f32.gmra.mxu0 %v136
    %v161 = vpop.f32.mrf.mxu0
    %v162 = vadd.f32 %v130, %v161
    %163 = vmatmul.f32.gmra.mxu0 %v139
    %v164 = vpop.f32.mrf.mxu0
    %v165 = vadd.f32 %v130, %v164
    %166 = vmatmul.f32.gmra.mxu0 %v142
    %v167 = vpop.f32.mrf.mxu0
    %v168 = vadd.f32 %v130, %v167
    %169 = vdwg.mxu0
    %170 = vmatpush.msra.mxu0 0.0
    %171 = vmatpush.msra.mxu0 0.0
    %172 = vmatpush.msra.mxu0 0.0
    %173 = vmatpush.msra.mxu0 0.0
    %174 = vmatpush.msra.mxu0 0.0
    %175 = vmatpush.msra.mxu0 0.0
    %176 = vmatpush.msra.mxu0 0.0
    %177 = vmatpush.msra.mxu0 0.0
    %178 = vmatpush.msra.mxu0 0.0
    %179 = vmatpush.msra.mxu0 0.0
    %180 = vmatpush.msra.mxu0 0.0
    %181 = vmatpush.msra.mxu0 0.0
    %182 = vmatpush.msra.mxu0 %v127
    %183 = vmatpush.msra.mxu0 %v125
    %184 = vmatpush.msra.mxu0 %v123
    %185 = vmatpush.msra.mxu0 %v121
    %186 = vmatmul.f32.gmra.mxu0 %v136
    %v187 = vpop.f32.mrf.mxu0
    %v188 = vadd.f32 %v131, %v187
    %189 = vmatmul.f32.gmra.mxu0 %v139
    %v190 = vpop.f32.mrf.mxu0
    %v191 = vadd.f32 %v131, %v190
    %192 = vmatmul.f32.gmra.mxu0 %v142
    %v193 = vpop.f32.mrf.mxu0
    %v194 = vadd.f32 %v131, %v193
    %195 = vdwg.mxu0
    %v196 = vmax.f32 %v162, 0.0
    %v197 = vmax.f32 %v188, 0.0
    %v198 = vmax.f32 %v165, 0.0
    %v199 = vmax.f32 %v191, 0.0
    %v200 = vmax.f32 %v168, 0.0
    %v201 = vmax.f32 %v194, 0.0
    %v202 = vld [vmem:[#allocation8] sm:$0xff]
    %v203 = vld [vmem:[#allocation8 + $0x8] sm:$0xff]
    %v204 = vld [vmem:[#allocation8 + $0x10] sm:$0xff]
    %v205 = vld [vmem:[#allocation8 + $0x18] sm:$0xff]
    %v206 = vld [vmem:[#allocation8 + $0x20] sm:$0xff]
    %v207 = vld [vmem:[#allocation8 + $0x28] sm:$0xff]
    %v208 = vld [vmem:[#allocation8 + $0x30] sm:$0xff]
    %v209 = vld [vmem:[#allocation8 + $0x38] sm:$0xff]
    %v210 = vld [vmem:[#allocation8 + $0x40] sm:$0xff]
    %v211 = vld [vmem:[#allocation8 + $0x48] sm:$0xff]
    %v212 = vld [vmem:[#allocation8 + $0x50] sm:$0xff]
    %v213 = vld [vmem:[#allocation8 + $0x58] sm:$0xff]
    %v214 = vld [vmem:[#allocation8 + $0x60] sm:$0xff]
    %v215 = vld [vmem:[#allocation8 + $0x68] sm:$0xff]
    %v216 = vld [vmem:[#allocation8 + $0x70] sm:$0xff]
    %v217 = vld [vmem:[#allocation8 + $0x78] sm:$0xff]
    %v218 = vld [vmem:[#allocation8 + $0x80] sm:$0xff]
    %v219 = vld [vmem:[#allocation8 + $0x88] sm:$0xff]
    %v220 = vld [vmem:[#allocation8 + $0x90] sm:$0xff]
    %v221 = vld [vmem:[#allocation8 + $0x98] sm:$0xff]
    %v222 = vld [vmem:[#allocation8 + $0xa0] sm:$0xff]
    %v223 = vld [vmem:[#allocation8 + $0xa8] sm:$0xff]
    %v224 = vld [vmem:[#allocation8 + $0xb0] sm:$0xff]
    %v225 = vld [vmem:[#allocation8 + $0xb8] sm:$0xff]
    %v226 = vld [vmem:[#allocation8 + $0xc0] sm:$0xff]
    %v227 = vld [vmem:[#allocation8 + $0xc8] sm:$0xff]
    %v228 = vld [vmem:[#allocation8 + $0xd0] sm:$0xff]
    %v229 = vld [vmem:[#allocation8 + $0xd8] sm:$0xff]
    %v230 = vld [vmem:[#allocation8 + $0xe0] sm:$0xff]
    %v231 = vld [vmem:[#allocation8 + $0xe8] sm:$0xff]
    %v232 = vld [vmem:[#allocation8 + $0xf0] sm:$0xff]
    %v233 = vld [vmem:[#allocation8 + $0xf8] sm:$0xff]
    %v234 = vld [vmem:[#allocation8 + $0x100] sm:$0xff]
    %v235 = vld [vmem:[#allocation8 + $0x108] sm:$0xff]
    %v236 = vld [vmem:[#allocation8 + $0x110] sm:$0xff]
    %v237 = vld [vmem:[#allocation8 + $0x118] sm:$0xff]
    %v238 = vld [vmem:[#allocation8 + $0x120] sm:$0xff]
    %v239 = vld [vmem:[#allocation8 + $0x128] sm:$0xff]
    %v240 = vld [vmem:[#allocation8 + $0x130] sm:$0xff]
    %v241 = vld [vmem:[#allocation8 + $0x138] sm:$0xff]
    %v242 = vld [vmem:[#allocation8 + $0x140] sm:$0xff]
    %v243 = vld [vmem:[#allocation8 + $0x148] sm:$0xff]
    %v244 = vld [vmem:[#allocation8 + $0x150] sm:$0xff]
    %v245 = vld [vmem:[#allocation8 + $0x158] sm:$0xff]
    %v246 = vld [vmem:[#allocation8 + $0x160] sm:$0xff]
    %v247 = vld [vmem:[#allocation8 + $0x168] sm:$0xff]
    %v248 = vld [vmem:[#allocation8 + $0x170] sm:$0xff]
    %v249 = vld [vmem:[#allocation8 + $0x178] sm:$0xff]
    %v250 = vld [vmem:[#allocation8 + $0x180] sm:$0xff]
    %v251 = vld [vmem:[#allocation8 + $0x188] sm:$0xff]
    %v252 = vld [vmem:[#allocation8 + $0x190] sm:$0xff]
    %v253 = vld [vmem:[#allocation8 + $0x198] sm:$0xff]
    %v254 = vld [vmem:[#allocation8 + $0x1a0] sm:$0xff]
    %v255 = vld [vmem:[#allocation8 + $0x1a8] sm:$0xff]
    %v256 = vld [vmem:[#allocation8 + $0x1b0] sm:$0xff]
    %v257 = vld [vmem:[#allocation8 + $0x1b8] sm:$0xff]
    %v258 = vld [vmem:[#allocation8 + $0x1c0] sm:$0xff]
    %v259 = vld [vmem:[#allocation8 + $0x1c8] sm:$0xff]
    %v260 = vld [vmem:[#allocation8 + $0x1d0] sm:$0xff]
    %v261 = vld [vmem:[#allocation8 + $0x1d8] sm:$0xff]
    %v262 = vld [vmem:[#allocation8 + $0x1e0] sm:$0xff]
    %v263 = vld [vmem:[#allocation8 + $0x1e8] sm:$0xff]
    %v264 = vld [vmem:[#allocation8 + $0x1f0] sm:$0xff]
    %v265 = vld [vmem:[#allocation8 + $0x1f8] sm:$0xff]
    %v266 = vld [vmem:[#allocation8 + $0x200] sm:$0xff]
    %v267 = vld [vmem:[#allocation8 + $0x208] sm:$0xff]
    %v268 = vld [vmem:[#allocation8 + $0x210] sm:$0xff]
    %v269 = vld [vmem:[#allocation8 + $0x218] sm:$0xff]
    %v270 = vld [vmem:[#allocation8 + $0x220] sm:$0xff]
    %v271 = vld [vmem:[#allocation8 + $0x228] sm:$0xff]
    %v272 = vld [vmem:[#allocation8 + $0x230] sm:$0xff]
    %v273 = vld [vmem:[#allocation8 + $0x238] sm:$0xff]
    %v274 = vld [vmem:[#allocation8 + $0x240] sm:$0xff]
    %v275 = vld [vmem:[#allocation8 + $0x248] sm:$0xff]
    %v276 = vld [vmem:[#allocation8 + $0x250] sm:$0xff]
    %v277 = vld [vmem:[#allocation8 + $0x258] sm:$0xff]
    %v278 = vld [vmem:[#allocation8 + $0x260] sm:$0xff]
    %v279 = vld [vmem:[#allocation8 + $0x268] sm:$0xff]
    %v280 = vld [vmem:[#allocation8 + $0x270] sm:$0xff]
    %v281 = vld [vmem:[#allocation8 + $0x278] sm:$0xff]
    %v282 = vld [vmem:[#allocation8 + $0x280] sm:$0xff]
    %v283 = vld [vmem:[#allocation8 + $0x288] sm:$0xff]
    %v284 = vld [vmem:[#allocation8 + $0x290] sm:$0xff]
    %v285 = vld [vmem:[#allocation8 + $0x298] sm:$0xff]
    %v286 = vld [vmem:[#allocation8 + $0x2a0] sm:$0xff]
    %v287 = vld [vmem:[#allocation8 + $0x2a8] sm:$0xff]
    %v288 = vld [vmem:[#allocation8 + $0x2b0] sm:$0xff]
    %v289 = vld [vmem:[#allocation8 + $0x2b8] sm:$0xff]
    %v290 = vld [vmem:[#allocation8 + $0x2c0] sm:$0xff]
    %v291 = vld [vmem:[#allocation8 + $0x2c8] sm:$0xff]
    %v292 = vld [vmem:[#allocation8 + $0x2d0] sm:$0xff]
    %v293 = vld [vmem:[#allocation8 + $0x2d8] sm:$0xff]
    %v294 = vld [vmem:[#allocation8 + $0x2e0] sm:$0xff]
    %v295 = vld [vmem:[#allocation8 + $0x2e8] sm:$0xff]
    %v296 = vld [vmem:[#allocation8 + $0x2f0] sm:$0xff]
    %v297 = vld [vmem:[#allocation8 + $0x2f8] sm:$0xff]
    %v298 = vld [vmem:[#allocation8 + $0x300] sm:$0xff]
    %v299 = vld [vmem:[#allocation8 + $0x308] sm:$0xff]
    %v300 = vld [vmem:[#allocation8 + $0x310] sm:$0xff]
    %v301 = vld [vmem:[#allocation8 + $0x318] sm:$0xff]
    %v302 = vld [vmem:[#allocation8 + $0x320] sm:$0xff]
    %v303 = vld [vmem:[#allocation8 + $0x328] sm:$0xff]
    %v304 = vld [vmem:[#allocation8 + $0x330] sm:$0xff]
    %v305 = vld [vmem:[#allocation8 + $0x338] sm:$0xff]
    %v306 = vld [vmem:[#allocation8 + $0x340] sm:$0xff]
    %v307 = vld [vmem:[#allocation8 + $0x348] sm:$0xff]
    %v308 = vld [vmem:[#allocation8 + $0x350] sm:$0xff]
    %v309 = vld [vmem:[#allocation8 + $0x358] sm:$0xff]
    %v310 = vld [vmem:[#allocation8 + $0x360] sm:$0xff]
    %v311 = vld [vmem:[#allocation8 + $0x368] sm:$0xff]
    %v312 = vld [vmem:[#allocation8 + $0x370] sm:$0xff]
    %v313 = vld [vmem:[#allocation8 + $0x378] sm:$0xff]
    %v314 = vld [vmem:[#allocation8 + $0x380] sm:$0xff]
    %v315 = vld [vmem:[#allocation8 + $0x388] sm:$0xff]
    %v316 = vld [vmem:[#allocation8 + $0x390] sm:$0xff]
    %v317 = vld [vmem:[#allocation8 + $0x398] sm:$0xff]
    %v318 = vld [vmem:[#allocation8 + $0x3a0] sm:$0xff]
    %v319 = vld [vmem:[#allocation8 + $0x3a8] sm:$0xff]
    %v320 = vld [vmem:[#allocation8 + $0x3b0] sm:$0xff]
    %v321 = vld [vmem:[#allocation8 + $0x3b8] sm:$0xff]
    %v322 = vld [vmem:[#allocation8 + $0x3c0] sm:$0xff]
    %v323 = vld [vmem:[#allocation8 + $0x3c8] sm:$0xff]
    %v324 = vld [vmem:[#allocation8 + $0x3d0] sm:$0xff]
    %v325 = vld [vmem:[#allocation8 + $0x3d8] sm:$0xff]
    %v326 = vld [vmem:[#allocation8 + $0x3e0] sm:$0xff]
    %v327 = vld [vmem:[#allocation8 + $0x3e8] sm:$0xff]
    %v328 = vld [vmem:[#allocation8 + $0x3f0] sm:$0xff]
    %v329 = vld [vmem:[#allocation8 + $0x3f8] sm:$0xff]
    %v330 = vld [vmem:[#allocation10] sm:$0xf]
    %v332 = vperm.slane %v330, 0
    %v333 = vperm.slane %v330, 1
    %v334 = vperm.slane %v330, 2
    %v335 = vperm.slane %v330, 3
    %340 = vmatpush.msra.mxu0 %v262
    %341 = vmatpush.msra.mxu0 %v258
    %342 = vmatpush.msra.mxu0 %v254
    %343 = vmatpush.msra.mxu0 %v250
    %344 = vmatpush.msra.mxu0 %v246
    %345 = vmatpush.msra.mxu0 %v242
    %346 = vmatpush.msra.mxu0 %v238
    %347 = vmatpush.msra.mxu0 %v234
    %348 = vmatpush.msra.mxu0 %v230
    %349 = vmatpush.msra.mxu0 %v226
    %350 = vmatpush.msra.mxu0 %v222
    %351 = vmatpush.msra.mxu0 %v218
    %352 = vmatpush.msra.mxu0 %v214
    %353 = vmatpush.msra.mxu0 %v210
    %354 = vmatpush.msra.mxu0 %v206
    %355 = vmatpush.msra.mxu0 %v202
    %356 = vmatmul.f32.gmra.mxu0 %v196
    %v357 = vpop.f32.mrf.mxu0
    %v358 = vadd.f32 %v332, %v357
    %359 = vmatmul.f32.gmra.mxu0 %v198
    %v360 = vpop.f32.mrf.mxu0
    %v361 = vadd.f32 %v332, %v360
    %362 = vmatmul.f32.gmra.mxu0 %v200
    %v363 = vpop.f32.mrf.mxu0
    %v364 = vadd.f32 %v332, %v363
    %365 = vdwg.mxu0
    %366 = vmatpush.msra.mxu0 %v326
    %367 = vmatpush.msra.mxu0 %v322
    %368 = vmatpush.msra.mxu0 %v318
    %369 = vmatpush.msra.mxu0 %v314
    %370 = vmatpush.msra.mxu0 %v310
    %371 = vmatpush.msra.mxu0 %v306
    %372 = vmatpush.msra.mxu0 %v302
    %373 = vmatpush.msra.mxu0 %v298
    %374 = vmatpush.msra.mxu0 %v294
    %375 = vmatpush.msra.mxu0 %v290
    %376 = vmatpush.msra.mxu0 %v286
    %377 = vmatpush.msra.mxu0 %v282
    %378 = vmatpush.msra.mxu0 %v278
    %379 = vmatpush.msra.mxu0 %v274
    %380 = vmatpush.msra.mxu0 %v270
    %381 = vmatpush.msra.mxu0 %v266
    %382 = vmatmul.f32.gmra.mxu0 %v197
    %v383 = vpop.f32.mrf.mxu0
    %v384 = vadd.f32 %v358, %v383
    %385 = vmatmul.f32.gmra.mxu0 %v199
    %v386 = vpop.f32.mrf.mxu0
    %v387 = vadd.f32 %v361, %v386
    %388 = vmatmul.f32.gmra.mxu0 %v201
    %v389 = vpop.f32.mrf.mxu0
    %v390 = vadd.f32 %v364, %v389
    %391 = vdwg.mxu0
    %392 = vmatpush.msra.mxu0 %v263
    %393 = vmatpush.msra.mxu0 %v259
    %394 = vmatpush.msra.mxu0 %v255
    %395 = vmatpush.msra.mxu0 %v251
    %396 = vmatpush.msra.mxu0 %v247
    %397 = vmatpush.msra.mxu0 %v243
    %398 = vmatpush.msra.mxu0 %v239
    %399 = vmatpush.msra.mxu0 %v235
    %400 = vmatpush.msra.mxu0 %v231
    %401 = vmatpush.msra.mxu0 %v227
    %402 = vmatpush.msra.mxu0 %v223
    %403 = vmatpush.msra.mxu0 %v219
    %404 = vmatpush.msra.mxu0 %v215
    %405 = vmatpush.msra.mxu0 %v211
    %406 = vmatpush.msra.mxu0 %v207
    %407 = vmatpush.msra.mxu0 %v203
    %408 = vmatmul.f32.gmra.mxu0 %v196
    %v409 = vpop.f32.mrf.mxu0
    %v410 = vadd.f32 %v333, %v409
    %411 = vmatmul.f32.gmra.mxu0 %v198
    %v412 = vpop.f32.mrf.mxu0
    %v413 = vadd.f32 %v333, %v412
    %414 = vmatmul.f32.gmra.mxu0 %v200
    %v415 = vpop.f32.mrf.mxu0
    %v416 = vadd.f32 %v333, %v415
    %417 = vdwg.mxu0
    %418 = vmatpush.msra.mxu0 %v327
    %419 = vmatpush.msra.mxu0 %v323
    %420 = vmatpush.msra.mxu0 %v319
    %421 = vmatpush.msra.mxu0 %v315
    %422 = vmatpush.msra.mxu0 %v311
    %423 = vmatpush.msra.mxu0 %v307
    %424 = vmatpush.msra.mxu0 %v303
    %425 = vmatpush.msra.mxu0 %v299
    %426 = vmatpush.msra.mxu0 %v295
    %427 = vmatpush.msra.mxu0 %v291
    %428 = vmatpush.msra.mxu0 %v287
    %429 = vmatpush.msra.mxu0 %v283
    %430 = vmatpush.msra.mxu0 %v279
    %431 = vmatpush.msra.mxu0 %v275
    %432 = vmatpush.msra.mxu0 %v271
    %433 = vmatpush.msra.mxu0 %v267
    %434 = vmatmul.f32.gmra.mxu0 %v197
    %v435 = vpop.f32.mrf.mxu0
    %v436 = vadd.f32 %v410, %v435
    %437 = vmatmul.f32.gmra.mxu0 %v199
    %v438 = vpop.f32.mrf.mxu0
    %v439 = vadd.f32 %v413, %v438
    %440 = vmatmul.f32.gmra.mxu0 %v201
    %v441 = vpop.f32.mrf.mxu0
    %v442 = vadd.f32 %v416, %v441
    %443 = vdwg.mxu0
    %444 = vmatpush.msra.mxu0 %v264
    %445 = vmatpush.msra.mxu0 %v260
    %446 = vmatpush.msra.mxu0 %v256
    %447 = vmatpush.msra.mxu0 %v252
    %448 = vmatpush.msra.mxu0 %v248
    %449 = vmatpush.msra.mxu0 %v244
    %450 = vmatpush.msra.mxu0 %v240
    %451 = vmatpush.msra.mxu0 %v236
    %452 = vmatpush.msra.mxu0 %v232
    %453 = vmatpush.msra.mxu0 %v228
    %454 = vmatpush.msra.mxu0 %v224
    %455 = vmatpush.msra.mxu0 %v220
    %456 = vmatpush.msra.mxu0 %v216
    %457 = vmatpush.msra.mxu0 %v212
    %458 = vmatpush.msra.mxu0 %v208
    %459 = vmatpush.msra.mxu0 %v204
    %460 = vmatmul.f32.gmra.mxu0 %v196
    %v461 = vpop.f32.mrf.mxu0
    %v462 = vadd.f32 %v334, %v461
    %463 = vmatmul.f32.gmra.mxu0 %v198
    %v464 = vpop.f32.mrf.mxu0
    %v465 = vadd.f32 %v334, %v464
    %466 = vmatmul.f32.gmra.mxu0 %v200
    %v467 = vpop.f32.mrf.mxu0
    %v468 = vadd.f32 %v334, %v467
    %469 = vdwg.mxu0
    %470 = vmatpush.msra.mxu0 %v328
    %471 = vmatpush.msra.mxu0 %v324
    %472 = vmatpush.msra.mxu0 %v320
    %473 = vmatpush.msra.mxu0 %v316
    %474 = vmatpush.msra.mxu0 %v312
    %475 = vmatpush.msra.mxu0 %v308
    %476 = vmatpush.msra.mxu0 %v304
    %477 = vmatpush.msra.mxu0 %v300
    %478 = vmatpush.msra.mxu0 %v296
    %479 = vmatpush.msra.mxu0 %v292
    %480 = vmatpush.msra.mxu0 %v288
    %481 = vmatpush.msra.mxu0 %v284
    %482 = vmatpush.msra.mxu0 %v280
    %483 = vmatpush.msra.mxu0 %v276
    %484 = vmatpush.msra.mxu0 %v272
    %485 = vmatpush.msra.mxu0 %v268
    %486 = vmatmul.f32.gmra.mxu0 %v197
    %v487 = vpop.f32.mrf.mxu0
    %v488 = vadd.f32 %v462, %v487
    %489 = vmatmul.f32.gmra.mxu0 %v199
    %v490 = vpop.f32.mrf.mxu0
    %v491 = vadd.f32 %v465, %v490
    %492 = vmatmul.f32.gmra.mxu0 %v201
    %v493 = vpop.f32.mrf.mxu0
    %v494 = vadd.f32 %v468, %v493
    %495 = vdwg.mxu0
    %496 = vmatpush.msra.mxu0 %v265
    %497 = vmatpush.msra.mxu0 %v261
    %498 = vmatpush.msra.mxu0 %v257
    %499 = vmatpush.msra.mxu0 %v253
    %500 = vmatpush.msra.mxu0 %v249
    %501 = vmatpush.msra.mxu0 %v245
    %502 = vmatpush.msra.mxu0 %v241
    %503 = vmatpush.msra.mxu0 %v237
    %504 = vmatpush.msra.mxu0 %v233
    %505 = vmatpush.msra.mxu0 %v229
    %506 = vmatpush.msra.mxu0 %v225
    %507 = vmatpush.msra.mxu0 %v221
    %508 = vmatpush.msra.mxu0 %v217
    %509 = vmatpush.msra.mxu0 %v213
    %510 = vmatpush.msra.mxu0 %v209
    %511 = vmatpush.msra.mxu0 %v205
    %512 = vmatmul.f32.gmra.mxu0 %v196
    %v513 = vpop.f32.mrf.mxu0
    %v514 = vadd.f32 %v335, %v513
    %515 = vmatmul.f32.gmra.mxu0 %v198
    %v516 = vpop.f32.mrf.mxu0
    %v517 = vadd.f32 %v335, %v516
    %518 = vmatmul.f32.gmra.mxu0 %v200
    %v519 = vpop.f32.mrf.mxu0
    %v520 = vadd.f32 %v335, %v519
    %521 = vdwg.mxu0
    %522 = vmatpush.msra.mxu0 %v329
    %523 = vmatpush.msra.mxu0 %v325
    %524 = vmatpush.msra.mxu0 %v321
    %525 = vmatpush.msra.mxu0 %v317
    %526 = vmatpush.msra.mxu0 %v313
    %527 = vmatpush.msra.mxu0 %v309
    %528 = vmatpush.msra.mxu0 %v305
    %529 = vmatpush.msra.mxu0 %v301
    %530 = vmatpush.msra.mxu0 %v297
    %531 = vmatpush.msra.mxu0 %v293
    %532 = vmatpush.msra.mxu0 %v289
    %533 = vmatpush.msra.mxu0 %v285
    %534 = vmatpush.msra.mxu0 %v281
    %535 = vmatpush.msra.mxu0 %v277
    %536 = vmatpush.msra.mxu0 %v273
    %537 = vmatpush.msra.mxu0 %v269
    %538 = vmatmul.f32.gmra.mxu0 %v197
    %v539 = vpop.f32.mrf.mxu0
    %v540 = vadd.f32 %v514, %v539
    %541 = vmatmul.f32.gmra.mxu0 %v199
    %v542 = vpop.f32.mrf.mxu0
    %v543 = vadd.f32 %v517, %v542
    %544 = vmatmul.f32.gmra.mxu0 %v201
    %v545 = vpop.f32.mrf.mxu0
    %v546 = vadd.f32 %v520, %v545
    %547 = vdwg.mxu0
    %v548 = vmax.f32 %v384, 0.0
    %v549 = vmax.f32 %v436, 0.0
    %v550 = vmax.f32 %v488, 0.0
    %v551 = vmax.f32 %v540, 0.0
    %v552 = vmax.f32 %v387, 0.0
    %v553 = vmax.f32 %v439, 0.0
    %v554 = vmax.f32 %v491, 0.0
    %v555 = vmax.f32 %v543, 0.0
    %v556 = vmax.f32 %v390, 0.0
    %v557 = vmax.f32 %v442, 0.0
    %v558 = vmax.f32 %v494, 0.0
    %v559 = vmax.f32 %v546, 0.0
    %v560 = vld [vmem:[#allocation11] sm:$0xff]
    %v561 = vld [vmem:[#allocation11 + $0x8] sm:$0xff]
    %v562 = vld [vmem:[#allocation11 + $0x10] sm:$0xff]
    %v563 = vld [vmem:[#allocation11 + $0x18] sm:$0xff]
    %v564 = vld [vmem:[#allocation11 + $0x20] sm:$0xff]
    %v565 = vld [vmem:[#allocation11 + $0x28] sm:$0xff]
    %v566 = vld [vmem:[#allocation11 + $0x30] sm:$0xff]
    %v567 = vld [vmem:[#allocation11 + $0x38] sm:$0xff]
    %v568 = vld [vmem:[#allocation11 + $0x40] sm:$0xff]
    %v569 = vld [vmem:[#allocation11 + $0x48] sm:$0xff]
    %v570 = vld [vmem:[#allocation11 + $0x50] sm:$0xff]
    %v571 = vld [vmem:[#allocation11 + $0x58] sm:$0xff]
    %v572 = vld [vmem:[#allocation11 + $0x60] sm:$0xff]
    %v573 = vld [vmem:[#allocation11 + $0x68] sm:$0xff]
    %v574 = vld [vmem:[#allocation11 + $0x70] sm:$0xff]
    %v575 = vld [vmem:[#allocation11 + $0x78] sm:$0xff]
    %v576 = vld [vmem:[#allocation11 + $0x80] sm:$0xff]
    %v577 = vld [vmem:[#allocation11 + $0x88] sm:$0xff]
    %v578 = vld [vmem:[#allocation11 + $0x90] sm:$0xff]
    %v579 = vld [vmem:[#allocation11 + $0x98] sm:$0xff]
    %v580 = vld [vmem:[#allocation11 + $0xa0] sm:$0xff]
    %v581 = vld [vmem:[#allocation11 + $0xa8] sm:$0xff]
    %v582 = vld [vmem:[#allocation11 + $0xb0] sm:$0xff]
    %v583 = vld [vmem:[#allocation11 + $0xb8] sm:$0xff]
    %v584 = vld [vmem:[#allocation11 + $0xc0] sm:$0xff]
    %v585 = vld [vmem:[#allocation11 + $0xc8] sm:$0xff]
    %v586 = vld [vmem:[#allocation11 + $0xd0] sm:$0xff]
    %v587 = vld [vmem:[#allocation11 + $0xd8] sm:$0xff]
    %v588 = vld [vmem:[#allocation11 + $0xe0] sm:$0xff]
    %v589 = vld [vmem:[#allocation11 + $0xe8] sm:$0xff]
    %v590 = vld [vmem:[#allocation11 + $0xf0] sm:$0xff]
    %v591 = vld [vmem:[#allocation11 + $0xf8] sm:$0xff]
    %v592 = vld [vmem:[#allocation11 + $0x100] sm:$0xff]
    %v593 = vld [vmem:[#allocation11 + $0x108] sm:$0xff]
    %v594 = vld [vmem:[#allocation11 + $0x110] sm:$0xff]
    %v595 = vld [vmem:[#allocation11 + $0x118] sm:$0xff]
    %v596 = vld [vmem:[#allocation11 + $0x120] sm:$0xff]
    %v597 = vld [vmem:[#allocation11 + $0x128] sm:$0xff]
    %v598 = vld [vmem:[#allocation11 + $0x130] sm:$0xff]
    %v599 = vld [vmem:[#allocation11 + $0x138] sm:$0xff]
    %v600 = vld [vmem:[#allocation11 + $0x140] sm:$0xff]
    %v601 = vld [vmem:[#allocation11 + $0x148] sm:$0xff]
    %v602 = vld [vmem:[#allocation11 + $0x150] sm:$0xff]
    %v603 = vld [vmem:[#allocation11 + $0x158] sm:$0xff]
    %v604 = vld [vmem:[#allocation11 + $0x160] sm:$0xff]
    %v605 = vld [vmem:[#allocation11 + $0x168] sm:$0xff]
    %v606 = vld [vmem:[#allocation11 + $0x170] sm:$0xff]
    %v607 = vld [vmem:[#allocation11 + $0x178] sm:$0xff]
    %v608 = vld [vmem:[#allocation11 + $0x180] sm:$0xff]
    %v609 = vld [vmem:[#allocation11 + $0x188] sm:$0xff]
    %v610 = vld [vmem:[#allocation11 + $0x190] sm:$0xff]
    %v611 = vld [vmem:[#allocation11 + $0x198] sm:$0xff]
    %v612 = vld [vmem:[#allocation11 + $0x1a0] sm:$0xff]
    %v613 = vld [vmem:[#allocation11 + $0x1a8] sm:$0xff]
    %v614 = vld [vmem:[#allocation11 + $0x1b0] sm:$0xff]
    %v615 = vld [vmem:[#allocation11 + $0x1b8] sm:$0xff]
    %v616 = vld [vmem:[#allocation11 + $0x1c0] sm:$0xff]
    %v617 = vld [vmem:[#allocation11 + $0x1c8] sm:$0xff]
    %v618 = vld [vmem:[#allocation11 + $0x1d0] sm:$0xff]
    %v619 = vld [vmem:[#allocation11 + $0x1d8] sm:$0xff]
    %v620 = vld [vmem:[#allocation11 + $0x1e0] sm:$0xff]
    %v621 = vld [vmem:[#allocation11 + $0x1e8] sm:$0xff]
    %v622 = vld [vmem:[#allocation11 + $0x1f0] sm:$0xff]
    %v623 = vld [vmem:[#allocation11 + $0x1f8] sm:$0xff]
    %v624 = vld [vmem:[%s6] sm:$0x1]
    %v626 = vperm.slane %v624, 0
    %628 = vmatpush.msra.mxu0 %v575
    %629 = vmatpush.msra.mxu0 %v574
    %630 = vmatpush.msra.mxu0 %v573
    %631 = vmatpush.msra.mxu0 %v572
    %632 = vmatpush.msra.mxu0 %v571
    %633 = vmatpush.msra.mxu0 %v570
    %634 = vmatpush.msra.mxu0 %v569
    %635 = vmatpush.msra.mxu0 %v568
    %636 = vmatpush.msra.mxu0 %v567
    %637 = vmatpush.msra.mxu0 %v566
    %638 = vmatpush.msra.mxu0 %v565
    %639 = vmatpush.msra.mxu0 %v564
    %640 = vmatpush.msra.mxu0 %v563
    %641 = vmatpush.msra.mxu0 %v562
    %642 = vmatpush.msra.mxu0 %v561
    %643 = vmatpush.msra.mxu0 %v560
    %644 = vmatmul.f32.gmra.mxu0 %v548
    %v645 = vpop.f32.mrf.mxu0
    %v646 = vadd.f32 %v626, %v645
    %647 = vmatmul.f32.gmra.mxu0 %v552
    %v648 = vpop.f32.mrf.mxu0
    %v649 = vadd.f32 %v626, %v648
    %650 = vmatmul.f32.gmra.mxu0 %v556
    %v651 = vpop.f32.mrf.mxu0
    %v652 = vadd.f32 %v626, %v651
    %653 = vdwg.mxu0
    %654 = vmatpush.msra.mxu0 %v591
    %655 = vmatpush.msra.mxu0 %v590
    %656 = vmatpush.msra.mxu0 %v589
    %657 = vmatpush.msra.mxu0 %v588
    %658 = vmatpush.msra.mxu0 %v587
    %659 = vmatpush.msra.mxu0 %v586
    %660 = vmatpush.msra.mxu0 %v585
    %661 = vmatpush.msra.mxu0 %v584
    %662 = vmatpush.msra.mxu0 %v583
    %663 = vmatpush.msra.mxu0 %v582
    %664 = vmatpush.msra.mxu0 %v581
    %665 = vmatpush.msra.mxu0 %v580
    %666 = vmatpush.msra.mxu0 %v579
    %667 = vmatpush.msra.mxu0 %v578
    %668 = vmatpush.msra.mxu0 %v577
    %669 = vmatpush.msra.mxu0 %v576
    %670 = vmatmul.f32.gmra.mxu0 %v549
    %v671 = vpop.f32.mrf.mxu0
    %v672 = vadd.f32 %v646, %v671
    %673 = vmatmul.f32.gmra.mxu0 %v553
    %v674 = vpop.f32.mrf.mxu0
    %v675 = vadd.f32 %v649, %v674
    %676 = vmatmul.f32.gmra.mxu0 %v557
    %v677 = vpop.f32.mrf.mxu0
    %v678 = vadd.f32 %v652, %v677
    %679 = vdwg.mxu0
    %680 = vmatpush.msra.mxu0 %v607
    %681 = vmatpush.msra.mxu0 %v606
    %682 = vmatpush.msra.mxu0 %v605
    %683 = vmatpush.msra.mxu0 %v604
    %684 = vmatpush.msra.mxu0 %v603
    %685 = vmatpush.msra.mxu0 %v602
    %686 = vmatpush.msra.mxu0 %v601
    %687 = vmatpush.msra.mxu0 %v600
    %688 = vmatpush.msra.mxu0 %v599
    %689 = vmatpush.msra.mxu0 %v598
    %690 = vmatpush.msra.mxu0 %v597
    %691 = vmatpush.msra.mxu0 %v596
    %692 = vmatpush.msra.mxu0 %v595
    %693 = vmatpush.msra.mxu0 %v594
    %694 = vmatpush.msra.mxu0 %v593
    %695 = vmatpush.msra.mxu0 %v592
    %696 = vmatmul.f32.gmra.mxu0 %v550
    %v697 = vpop.f32.mrf.mxu0
    %v698 = vadd.f32 %v672, %v697
    %699 = vmatmul.f32.gmra.mxu0 %v554
    %v700 = vpop.f32.mrf.mxu0
    %v701 = vadd.f32 %v675, %v700
    %702 = vmatmul.f32.gmra.mxu0 %v558
    %v703 = vpop.f32.mrf.mxu0
    %v704 = vadd.f32 %v678, %v703
    %705 = vdwg.mxu0
    %706 = vmatpush.msra.mxu0 %v623
    %707 = vmatpush.msra.mxu0 %v622
    %708 = vmatpush.msra.mxu0 %v621
    %709 = vmatpush.msra.mxu0 %v620
    %710 = vmatpush.msra.mxu0 %v619
    %711 = vmatpush.msra.mxu0 %v618
    %712 = vmatpush.msra.mxu0 %v617
    %713 = vmatpush.msra.mxu0 %v616
    %714 = vmatpush.msra.mxu0 %v615
    %715 = vmatpush.msra.mxu0 %v614
    %716 = vmatpush.msra.mxu0 %v613
    %717 = vmatpush.msra.mxu0 %v612
    %718 = vmatpush.msra.mxu0 %v611
    %719 = vmatpush.msra.mxu0 %v610
    %720 = vmatpush.msra.mxu0 %v609
    %721 = vmatpush.msra.mxu0 %v608
    %722 = vmatmul.f32.gmra.mxu0 %v551
    %v723 = vpop.f32.mrf.mxu0
    %v724 = vadd.f32 %v698, %v723
    %725 = vmatmul.f32.gmra.mxu0 %v555
    %v726 = vpop.f32.mrf.mxu0
    %v727 = vadd.f32 %v701, %v726
    %728 = vmatmul.f32.gmra.mxu0 %v559
    %v729 = vpop.f32.mrf.mxu0
    %v730 = vadd.f32 %v704, %v729
    %731 = vdwg.mxu0
    %v732 = vxor.u32 %v724, 2147483648
    %v733 = vxor.u32 %v727, 2147483648
    %v734 = vxor.u32 %v730, 2147483648
    %v735 = vmul.f32 %v732, 1.442695
    %v736 = vpow.pop %v735
    %v737 = vmul.f32 %v733, 1.442695
    %v738 = vpow.pop %v737
    %v739 = vmul.f32 %v734, 1.442695
    %v740 = vpow.pop %v739
    %v741 = vadd.f32 %v736, 1.0
    %v742 = vadd.f32 %v738, 1.0
    %v743 = vadd.f32 %v740, 1.0
    %v744 = vrcp.pop %v741
    %v745 = vmul.f32 %v741, %v744
    %v746 = vsub.f32 1.0, %v745
    %v747 = vmul.f32 %v744, %v746
    %v748 = vadd.f32 %v744, %v747
    %vm749 = vweird.f32 %v741
    %vm750 = vweird.f32 %v744
    %vm751 = vmor %vm749, %vm750
    %v752 = vsel %vm751, %v744, %v748
    %v753 = vand.u32 2147483647, %v741
    %vm754 = vcmp.eq.f32.partialorder %v753, 8.507059e+37
    %v755 = vand.u32 %v741, 2147483648
    %v756 = vor.u32 1.1754944e-38, %v755
    %v757 = vsel %vm754, %v756, %v752
    %v758 = vmul.f32 1.0, %v757
    %v759 = vrcp.pop %v742
    %v760 = vmul.f32 %v742, %v759
    %v761 = vsub.f32 1.0, %v760
    %v762 = vmul.f32 %v759, %v761
    %v763 = vadd.f32 %v759, %v762
    %vm764 = vweird.f32 %v742
    %vm765 = vweird.f32 %v759
    %vm766 = vmor %vm764, %vm765
    %v767 = vsel %vm766, %v759, %v763
    %v768 = vand.u32 2147483647, %v742
    %vm769 = vcmp.eq.f32.partialorder %v768, 8.507059e+37
    %v770 = vand.u32 %v742, 2147483648
    %v771 = vor.u32 1.1754944e-38, %v770
    %v772 = vsel %vm769, %v771, %v767
    %v773 = vmul.f32 1.0, %v772
    %v774 = vrcp.pop %v743
    %v775 = vmul.f32 %v743, %v774
    %v776 = vsub.f32 1.0, %v775
    %v777 = vmul.f32 %v774, %v776
    %v778 = vadd.f32 %v774, %v777
    %vm779 = vweird.f32 %v743
    %vm780 = vweird.f32 %v774
    %vm781 = vmor %vm779, %vm780
    %v782 = vsel %vm781, %v774, %v778
    %v783 = vand.u32 2147483647, %v743
    %vm784 = vcmp.eq.f32.partialorder %v783, 8.507059e+37
    %v785 = vand.u32 %v743, 2147483648
    %v786 = vor.u32 1.1754944e-38, %v785
    %v787 = vsel %vm784, %v786, %v782
    %v788 = vmul.f32 1.0, %v787
    %789 = vst [vmem:[#allocation13] sm:$0xff] %v758
    %790 = vst [vmem:[#allocation13 + $0x8] sm:$0xff] %v773
    %791 = vst [vmem:[#allocation13 + $0x10] sm:$0xff] %v788
    // Predicated region
    $region54: #{tpu_custom_call.1} parent=1 // pred_check
      _
    $region55: #{tpu_custom_call.1} parent=1 // pred_check_branch
      %793 = sbr.rel (0) target = $region57
    $region56: #{tpu_custom_call.1} parent=1 // pred_region
      %795 = vsyncadd [#allocation4], 0
      %s796 = sshll.u32 [#allocation13], 4
      %s797 = int_to_ptr.vmem [resolvable:$true] %s796
      %s798 = sshll.u32 %s7, 4
      %s799 = int_to_ptr.hbm [resolvable:$true] %s798
      %804 = dma.vmem_to_hbm [thread:$0]  %s797, 384, %s799, [#allocation4], 128, 128, 8
    $region57: #{tpu_custom_call.1} parent=1 // pred_fallthru
      _
    // Predicated region
    $region58: #{tpu_custom_call.1} parent=1 // pred_check
      _
    $region59: #{tpu_custom_call.1} parent=1 // pred_check_branch
      %806 = sbr.rel (0) target = $region61
    $region60: #{tpu_custom_call.1} parent=1 // pred_region
      %808 = dma.done [#allocation4], 384
    $region61: #{tpu_custom_call.1} parent=1 // pred_fallthru
      _
    %809 = vsyncpa [#allocation3], 1
    %810 = vsyncpa [#allocation6], 1
    %811 = vsyncpa [#allocation9], 1
    %812 = vsyncpa [#allocation12], 1
    %813 = vsyncpa [#allocation4], 1

</llo_original>
